<compile_context>
chip_gen: v5e
topology: v5e:2x2
jax: 0.10.0
libtpu: 0.0.40
codegen_flags: <defaults>
</compile_context>

<pallas_src>
import functools

import numpy as np
import jax
import jax.numpy as jnp
from jax.experimental import pallas as pl
from jax.experimental.pallas import tpu as pltpu


# Parity planes reachable by each spatial shift q in {-1, 0, +1} of the downsampled grid:
# _PRANGE[q] = half-open (lo, hi) range of reachable parities along that axis.
_PRANGE = {-1: (1, 2), 0: (0, 2), 1: (0, 1)}
_LANE = 128
_VMEM_TILE_BUDGET = 40 << 20   # target working set; safe under v7x's 64 MiB with headroom


def _build_shift_weights(w_oihw):
    """Torch conv weight (Cout, Cin, 3, 3) -> per-shift slabs (3, 3, 4*Cin, 4*Cout).

    Row index    = (py*2 + px)*Cin + ci   (input parity plane, input channel)
    Column index = c*4 + ry*2 + rx        (PyTorch PixelUnshuffle(2) channel order)
    Slab (qy+1, qx+1) multiplies the parity planes shifted by (qy, qx) in the
    downsampled (H/2, W/2) grid.  Built once on host with numpy (hoisted out of the
    per-call path).
    """
    w = np.asarray(w_oihw, dtype=np.float32)
    Cout, Cin = w.shape[0], w.shape[1]
    a = np.zeros((3, 3, 2, 2, Cin, Cout, 2, 2), dtype=np.float32)
    for ry in range(2):
        for rx in range(2):
            for dy in range(3):
                for dx in range(3):
                    u, v = ry + dy - 1, rx + dx - 1
                    py, px = u % 2, v % 2
                    qy, qx = (u - py) // 2, (v - px) // 2
                    a[qy + 1, qx + 1, py, px, :, :, ry, rx] = w[:, :, dy, dx].T

    # The kernel widens each shift's K slice to the contiguous plane range and to
    # 128-lane multiples; it relies on rows of unreachable parity planes being zero.
    for qy in (-1, 0, 1):
        for qx in (-1, 0, 1):
            for py in range(2):
                for px in range(2):
                    reachable = (_PRANGE[qy][0] <= py < _PRANGE[qy][1]
                                 and _PRANGE[qx][0] <= px < _PRANGE[qx][1])
                    if not reachable:
                        assert not np.any(a[qy + 1, qx + 1, py, px]), (
                            "weight layout invariant broken: unreachable plane nonzero")
    return a.reshape(3, 3, 4 * Cin, 4 * Cout)


def _downsample_kernel(a_ref, b1_ref, b2_ref, w_ref, o_ref):
    """One (batch, H-tile) step of the fused conv3x3 + PixelUnshuffle(2).

    a_ref  : (1, tHo, Wo+2, 4*Cin) bf16  padded-plane rows [i*tHo, (i+1)*tHo)
    b1_ref : (1, 1,   Wo+2, 4*Cin) bf16  padded-plane row  (i+1)*tHo      (look-ahead)
    b2_ref : (1, 1,   Wo+2, 4*Cin) bf16  padded-plane row  (i+1)*tHo + 1  (look-ahead)
    w_ref  : (3, 3, 4*Cin, 4*Cout) bf16  per-shift weight slabs (constant block)
    o_ref  : (1, tHo, Wo, 4*Cout)  f32   fused conv + pixel-unshuffle output tile

    The 9 spatial shifts become matmuls (K up to 4*Cin, N = 4*Cout) accumulated directly
    into o_ref; the row that each shift needs is picked from a_ref / b1_ref / b2_ref, so
    no staging buffer, no zero-fill and no boundary branching are needed (the zero halo
    ring already lives in HBM).
    """
    tHo = a_ref.shape[1]
    C4 = a_ref.shape[3]
    Wo = o_ref.shape[2]
    Cin = C4 // 4

    first = True
    for qy in (-1, 0, 1):
        py_lo, py_hi = _PRANGE[qy]
        for qx in (-1, 0, 1):
            px_lo, px_hi = _PRANGE[qx]
            # Contiguous channel (K) range of parity planes this shift can touch,
            # rounded outward to 128-lane multiples; rows outside the reachable planes
            # are structural zeros in the slab (asserted in _build_shift_weights).
            p_lo = py_lo * 2 + px_lo
            p_hi = (py_hi - 1) * 2 + (px_hi - 1) + 1
            c_lo = (p_lo * Cin // _LANE) * _LANE
            c_hi = min(-(-(p_hi * Cin) // _LANE) * _LANE, C4)
            w_slab = w_ref[qy + 1, qx + 1, c_lo:c_hi, :]
            cols = slice(1 + qx, 1 + qx + Wo)

            # Row pieces: (source ref, source row range on that ref, dest row start).
            # Window row r_loc + qy + 1 lives in a_ref for < tHo, else in b1/b2.
            if qy == -1:
                pieces = [(a_ref, 0, tHo, 0)]
            elif qy == 0:
                pieces = ([(a_ref, 1, tHo, 0)] if tHo > 1 else [])
                pieces += [(b1_ref, 0, 1, tHo - 1)]
            else:  # qy == +1
                pieces = ([(a_ref, 2, tHo, 0)] if tHo > 2 else [])
                pieces += ([(b1_ref, 0, 1, tHo - 2)] if tHo >= 2 else [])
                pieces += [(b2_ref, 0, 1, tHo - 1)]

            for src, r_lo, r_hi, d_lo in pieces:
                n = r_hi - r_lo
                patch = src[0, r_lo:r_hi, cols, c_lo:c_hi]
                part = jax.lax.dot_general(
                    patch, w_slab,
                    dimension_numbers=(((2,), (0,)), ((), ())),
                    preferred_element_type=jnp.float32)
                if first:
                    # qy=-1, qx=-1 covers all tHo output rows: initialize the output
                    # block with it instead of a separate zero-fill pass.
                    o_ref[0] = part.astype(o_ref.dtype)
                    first = False
                else:
                    o_ref[0, d_lo:d_lo + n] += part.astype(o_ref.dtype)


def _vmem_bytes(tile_ho, Wo, Cin, Cout):
    # Auto-pipeline double-buffers every spec (weights counted x2 conservatively).
    in_bytes = 2 * (tile_ho + 2) * (Wo + 2) * 4 * Cin * 2      # main + 2 halo rows, bf16
    w_bytes = 2 * 9 * (4 * Cin) * (4 * Cout) * 2               # bf16
    out_bytes = 2 * tile_ho * Wo * (4 * Cout) * 4              # f32
    return in_bytes + w_bytes + out_bytes


def _pick_tile_ho(batch, Ho, Wo, Cin, Cout, budget_bytes=_VMEM_TILE_BUDGET):
    """Largest divisor of Ho whose working set fits the VMEM budget, preferring at
    least two grid steps so the pipeline / v7x megacore have something to overlap."""
    divisors = [d for d in range(Ho, 0, -1) if Ho % d == 0]
    for want_two_steps in (True, False):
        for t in divisors:
            if _vmem_bytes(t, Wo, Cin, Cout) > budget_bytes:
                continue
            if want_two_steps and batch * (Ho // t) < 2:
                continue
            return t
    # TODO(synk): add a W-tiling grid axis for rows so wide that even tile_ho=1 blows
    # the budget (mainly matters under v7x's 64 MiB VMEM).
    return 1


def _downsample_forward(x_nchw, wq, *, tile_ho=None):
    """x: (B, n_feat, H, W); wq: (3, 3, 4*n_feat, 2*n_feat) bf16 shift slabs.
    Returns (B, 2*n_feat, H//2, W//2) in x.dtype."""
    B, Cin, H, W = x_nchw.shape
    assert H % 2 == 0 and W % 2 == 0, "PixelUnshuffle(2) needs even H and W"
    Ho, Wo = H // 2, W // 2
    assert wq.shape[:3] == (3, 3, 4 * Cin)
    Cout = wq.shape[3] // 4

    if tile_ho is None:
        tile_ho = _pick_tile_ho(B, Ho, Wo, Cin, Cout)
    assert Ho % tile_ho == 0
    n_h = Ho // tile_ho

    # Input layout: 2x2 parity planes stacked on the channel axis + a zero halo ring
    # (this *is* the conv's padding=1), bf16 for the MXU.
    # TODO(synk): if this layer sits in a chain, keep activations in this layout across
    # layers instead of paying the NCHW<->planes transposes around every call.
    planes = jnp.transpose(
        x_nchw.reshape(B, Cin, Ho, 2, Wo, 2), (0, 2, 4, 3, 5, 1)
    ).reshape(B, Ho, Wo, 4 * Cin).astype(jnp.bfloat16)
    planes = jnp.pad(planes, ((0, 0), (1, 1), (1, 1), (0, 0)))   # (B, Ho+2, Wo+2, 4Cin)

    vmem_need = _vmem_bytes(tile_ho, Wo, Cin, Cout)
    vmem_limit = int(max(vmem_need + (8 << 20), 32 << 20))

    out = pl.pallas_call(
        _downsample_kernel,
        out_shape=jax.ShapeDtypeStruct((B, Ho, Wo, 4 * Cout), jnp.float32),
        grid=(B, n_h),
        in_specs=[
            # main window: padded-plane rows [i*tile_ho, (i+1)*tile_ho)
            pl.BlockSpec((1, tile_ho, Wo + 2, 4 * Cin), lambda b, i: (b, i, 0, 0)),
            # two 1-row look-ahead blocks: padded rows (i+1)*tile_ho and (i+1)*tile_ho+1
            pl.BlockSpec((1, 1, Wo + 2, 4 * Cin),
                         lambda b, i: (b, (i + 1) * tile_ho, 0, 0)),
            pl.BlockSpec((1, 1, Wo + 2, 4 * Cin),
                         lambda b, i: (b, (i + 1) * tile_ho + 1, 0, 0)),
            # per-shift weight slabs: constant block index -> fetched once
            pl.BlockSpec((3, 3, 4 * Cin, 4 * Cout), lambda b, i: (0, 0, 0, 0)),
        ],
        out_specs=pl.BlockSpec((1, tile_ho, Wo, 4 * Cout), lambda b, i: (b, i, 0, 0)),
        compiler_params=pltpu.CompilerParams(
            dimension_semantics=("parallel", "parallel"),
            vmem_limit_bytes=vmem_limit),
    )(planes, planes, planes, wq)

    # Kernel output is (B, H/2, W/2, 2*n_feat) with PyTorch's PixelUnshuffle channel
    # order already on the (lane-dense) last axis; one final transpose back to NCHW.
    # TODO(synk): emit bf16 from the kernel (with an f32 scratch accumulator) if the
    # consumer tolerates it -- halves the output HBM bytes of this mem-bound op.
    return jnp.transpose(out, (0, 3, 1, 2)).astype(x_nchw.dtype)


class DownsamplePallas:
    """Drop-in forward for the PyTorch `Downsample` module (weights fixed at init)."""

    def __init__(self, weight_oihw, *, tile_ho=None):
        w = np.asarray(weight_oihw, dtype=np.float32)
        assert w.ndim == 4 and w.shape[2:] == (3, 3) and w.shape[1] == 2 * w.shape[0], \
            "expected Conv2d(n_feat, n_feat//2, 3, 3) weight"
        self.n_feat = int(w.shape[1])
        # Hoisted out of the per-call path: built once on host, cached as bf16.
        self.wq = jnp.asarray(_build_shift_weights(w), dtype=jnp.bfloat16)
        self._fwd = jax.jit(functools.partial(_downsample_forward, tile_ho=tile_ho))

    def __call__(self, x_nchw):
        return self._fwd(x_nchw, self.wq)


def _pixel_unshuffle_nchw(x, r=2):
    """Reference-only PixelUnshuffle on NCHW."""
    B, C, H, W = x.shape
    x = x.reshape(B, C, H // r, r, W // r, r)
    x = x.transpose(0, 1, 3, 5, 2, 4)
    return x.reshape(B, C * r * r, H // r, W // r)


if __name__ == "__main__":
    B, n_feat, H, W = 2, 8, 16, 16

    key = jax.random.PRNGKey(0)
    kx, kw = jax.random.split(key)
    x = jax.random.normal(kx, (B, n_feat, H, W), dtype=jnp.float32)
    weight = jax.random.normal(kw, (n_feat // 2, n_feat, 3, 3), dtype=jnp.float32) * 0.1

    # tile_ho=4 -> 2 H-tiles per image: exercises both the interior look-ahead rows
    # (real data belonging to the next tile) and the zero-ring image boundary rows.
    mod = DownsamplePallas(weight, tile_ho=4)
    out = jax.block_until_ready(mod(x))
    assert out.shape == (B, 2 * n_feat, H // 2, W // 2), out.shape

    # Reference: XLA conv + pixel-unshuffle on the same bf16-rounded operands
    # (the kernel feeds the MXU bf16 inputs with f32 accumulation).
    xr = x.astype(jnp.bfloat16).astype(jnp.float32)
    wr = weight.astype(jnp.bfloat16).astype(jnp.float32)
    conv_ref = jax.lax.conv_general_dilated(
        xr, wr, window_strides=(1, 1), padding="SAME",
        dimension_numbers=("NCHW", "OIHW", "NCHW"),
        precision=jax.lax.Precision.HIGHEST)
    ref = _pixel_unshuffle_nchw(conv_ref, r=2)
    max_err = float(jnp.max(jnp.abs(out - ref)))
    assert jnp.allclose(out, ref, atol=2e-3, rtol=2e-3), max_err

    print("KERNEL_OK")
</pallas_src>

<mosaic_0001>
module attributes {stable_mosaic.version = 11 : i64} {
  func.func @_downsample_kernel(%arg0: i32, %arg1: i32, %arg2: memref<1x4x10x32xbf16, #tpu.memory_space<vmem>>, %arg3: memref<1x1x10x32xbf16, #tpu.memory_space<vmem>>, %arg4: memref<1x1x10x32xbf16, #tpu.memory_space<vmem>>, %arg5: memref<3x3x32x16xbf16, #tpu.memory_space<vmem>>, %arg6: memref<1x4x8x16xf32, #tpu.memory_space<vmem>>) attributes {dimension_semantics = [#tpu.dimension_semantics<parallel>, #tpu.dimension_semantics<parallel>], iteration_bounds = array<i64: 2, 2>, scalar_prefetch = 0 : i64, scratch_operands = 0 : i64, tpu.core_type = #tpu.core_type<tc>, window_params = [{transform_indices = @transform_0, window_bounds = array<i64: 1, 4, 10, 32>}, {transform_indices = @transform_1, window_bounds = array<i64: 1, 1, 10, 32>}, {transform_indices = @transform_2, window_bounds = array<i64: 1, 1, 10, 32>}, {pipeline_mode = #tpu.pipeline_mode<synchronous>, transform_indices = @transform_3, window_bounds = array<i64: 3, 3, 32, 16>}, {transform_indices = @transform_4, window_bounds = array<i64: 1, 4, 8, 16>}]} {
    %c0 = arith.constant 0 : index
    %c0_0 = arith.constant 0 : index
    %c0_1 = arith.constant 0 : index
    %c0_2 = arith.constant 0 : index
    %0 = vector.load %arg5[%c0, %c0_0, %c0_1, %c0_2] : memref<3x3x32x16xbf16, #tpu.memory_space<vmem>>, vector<1x1x32x16xbf16>
    %1 = vector.shape_cast %0 : vector<1x1x32x16xbf16> to vector<32x16xbf16>
    %c0_3 = arith.constant 0 : index
    %c0_4 = arith.constant 0 : index
    %c0_5 = arith.constant 0 : index
    %c0_6 = arith.constant 0 : index
    %2 = vector.load %arg2[%c0_3, %c0_4, %c0_5, %c0_6] : memref<1x4x10x32xbf16, #tpu.memory_space<vmem>>, vector<1x4x8x32xbf16>
    %3 = vector.shape_cast %2 : vector<1x4x8x32xbf16> to vector<4x8x32xbf16>
    %cst = arith.constant dense<0.000000e+00> : vector<4x8x16xf32>
    %4 = tpu.matmul %3, %1, %cst {dimension_numbers = #tpu.dot_dimension_numbers<[2], [0], [0, 1], [1], [0, 0, 0, 1, 1, 1], [], []>} : vector<4x8x32xbf16>, vector<32x16xbf16>, vector<4x8x16xf32> -> vector<4x8x16xf32>
    %c0_7 = arith.constant 0 : index
    %c0_8 = arith.constant 0 : index
    %c0_9 = arith.constant 0 : index
    %c0_10 = arith.constant 0 : index
    %5 = vector.load %arg6[%c0_7, %c0_8, %c0_9, %c0_10] : memref<1x4x8x16xf32, #tpu.memory_space<vmem>>, vector<1x4x8x16xf32>
    %6 = vector.shape_cast %5 : vector<1x4x8x16xf32> to vector<4x8x16xf32>
    %7 = vector.shape_cast %4 : vector<4x8x16xf32> to vector<1x4x8x16xf32>
    tpu.vector_store %arg6[%c0_7, %c0_8, %c0_9, %c0_10], %7 {strides = array<i32>} : memref<1x4x8x16xf32, #tpu.memory_space<vmem>>, vector<1x4x8x16xf32>,
    %c0_11 = arith.constant 0 : index
    %c1 = arith.constant 1 : index
    %c0_12 = arith.constant 0 : index
    %c0_13 = arith.constant 0 : index
    %8 = vector.load %arg5[%c0_11, %c1, %c0_12, %c0_13] : memref<3x3x32x16xbf16, #tpu.memory_space<vmem>>, vector<1x1x32x16xbf16>
    %9 = vector.shape_cast %8 : vector<1x1x32x16xbf16> to vector<32x16xbf16>
    %c0_14 = arith.constant 0 : index
    %c0_15 = arith.constant 0 : index
    %c1_16 = arith.constant 1 : index
    %c0_17 = arith.constant 0 : index
    %10 = vector.load %arg2[%c0_14, %c0_15, %c1_16, %c0_17] : memref<1x4x10x32xbf16, #tpu.memory_space<vmem>>, vector<1x4x8x32xbf16>
    %11 = vector.shape_cast %10 : vector<1x4x8x32xbf16> to vector<4x8x32xbf16>
    %cst_18 = arith.constant dense<0.000000e+00> : vector<4x8x16xf32>
    %12 = tpu.matmul %11, %9, %cst_18 {dimension_numbers = #tpu.dot_dimension_numbers<[2], [0], [0, 1], [1], [0, 0, 0, 1, 1, 1], [], []>} : vector<4x8x32xbf16>, vector<32x16xbf16>, vector<4x8x16xf32> -> vector<4x8x16xf32>
    %c0_19 = arith.constant 0 : index
    %c0_20 = arith.constant 0 : index
    %c0_21 = arith.constant 0 : index
    %c0_22 = arith.constant 0 : index
    %13 = vector.load %arg6[%c0_19, %c0_20, %c0_21, %c0_22] : memref<1x4x8x16xf32, #tpu.memory_space<vmem>>, vector<1x4x8x16xf32>
    %14 = vector.shape_cast %13 : vector<1x4x8x16xf32> to vector<4x8x16xf32>
    %15 = arith.addf %14, %12 : vector<4x8x16xf32>
    %c0_23 = arith.constant 0 : index
    %c0_24 = arith.constant 0 : index
    %c0_25 = arith.constant 0 : index
    %c0_26 = arith.constant 0 : index
    %16 = vector.load %arg6[%c0_23, %c0_24, %c0_25, %c0_26] : memref<1x4x8x16xf32, #tpu.memory_space<vmem>>, vector<1x4x8x16xf32>
    %17 = vector.shape_cast %16 : vector<1x4x8x16xf32> to vector<4x8x16xf32>
    %18 = vector.shape_cast %15 : vector<4x8x16xf32> to vector<1x4x8x16xf32>
    tpu.vector_store %arg6[%c0_23, %c0_24, %c0_25, %c0_26], %18 {strides = array<i32>} : memref<1x4x8x16xf32, #tpu.memory_space<vmem>>, vector<1x4x8x16xf32>,
    %c0_27 = arith.constant 0 : index
    %c2 = arith.constant 2 : index
    %c0_28 = arith.constant 0 : index
    %c0_29 = arith.constant 0 : index
    %19 = vector.load %arg5[%c0_27, %c2, %c0_28, %c0_29] : memref<3x3x32x16xbf16, #tpu.memory_space<vmem>>, vector<1x1x32x16xbf16>
    %20 = vector.shape_cast %19 : vector<1x1x32x16xbf16> to vector<32x16xbf16>
    %c0_30 = arith.constant 0 : index
    %c0_31 = arith.constant 0 : index
    %c2_32 = arith.constant 2 : index
    %c0_33 = arith.constant 0 : index
    %21 = vector.load %arg2[%c0_30, %c0_31, %c2_32, %c0_33] : memref<1x4x10x32xbf16, #tpu.memory_space<vmem>>, vector<1x4x8x32xbf16>
    %22 = vector.shape_cast %21 : vector<1x4x8x32xbf16> to vector<4x8x32xbf16>
    %cst_34 = arith.constant dense<0.000000e+00> : vector<4x8x16xf32>
    %23 = tpu.matmul %22, %20, %cst_34 {dimension_numbers = #tpu.dot_dimension_numbers<[2], [0], [0, 1], [1], [0, 0, 0, 1, 1, 1], [], []>} : vector<4x8x32xbf16>, vector<32x16xbf16>, vector<4x8x16xf32> -> vector<4x8x16xf32>
    %c0_35 = arith.constant 0 : index
    %c0_36 = arith.constant 0 : index
    %c0_37 = arith.constant 0 : index
    %c0_38 = arith.constant 0 : index
    %24 = vector.load %arg6[%c0_35, %c0_36, %c0_37, %c0_38] : memref<1x4x8x16xf32, #tpu.memory_space<vmem>>, vector<1x4x8x16xf32>
    %25 = vector.shape_cast %24 : vector<1x4x8x16xf32> to vector<4x8x16xf32>
    %26 = arith.addf %25, %23 : vector<4x8x16xf32>
    %c0_39 = arith.constant 0 : index
    %c0_40 = arith.constant 0 : index
    %c0_41 = arith.constant 0 : index
    %c0_42 = arith.constant 0 : index
    %27 = vector.load %arg6[%c0_39, %c0_40, %c0_41, %c0_42] : memref<1x4x8x16xf32, #tpu.memory_space<vmem>>, vector<1x4x8x16xf32>
    %28 = vector.shape_cast %27 : vector<1x4x8x16xf32> to vector<4x8x16xf32>
    %29 = vector.shape_cast %26 : vector<4x8x16xf32> to vector<1x4x8x16xf32>
    tpu.vector_store %arg6[%c0_39, %c0_40, %c0_41, %c0_42], %29 {strides = array<i32>} : memref<1x4x8x16xf32, #tpu.memory_space<vmem>>, vector<1x4x8x16xf32>,
    %c1_43 = arith.constant 1 : index
    %c0_44 = arith.constant 0 : index
    %c0_45 = arith.constant 0 : index
    %c0_46 = arith.constant 0 : index
    %30 = vector.load %arg5[%c1_43, %c0_44, %c0_45, %c0_46] : memref<3x3x32x16xbf16, #tpu.memory_space<vmem>>, vector<1x1x32x16xbf16>
    %31 = vector.shape_cast %30 : vector<1x1x32x16xbf16> to vector<32x16xbf16>
    %c0_47 = arith.constant 0 : index
    %c1_48 = arith.constant 1 : index
    %c0_49 = arith.constant 0 : index
    %c0_50 = arith.constant 0 : index
    %32 = vector.load %arg2[%c0_47, %c1_48, %c0_49, %c0_50] : memref<1x4x10x32xbf16, #tpu.memory_space<vmem>>, vector<1x3x8x32xbf16>
    %33 = vector.shape_cast %32 : vector<1x3x8x32xbf16> to vector<3x8x32xbf16>
    %cst_51 = arith.constant dense<0.000000e+00> : vector<3x8x16xf32>
    %34 = tpu.matmul %33, %31, %cst_51 {dimension_numbers = #tpu.dot_dimension_numbers<[2], [0], [0, 1], [1], [0, 0, 0, 1, 1, 1], [], []>} : vector<3x8x32xbf16>, vector<32x16xbf16>, vector<3x8x16xf32> -> vector<3x8x16xf32>
    %c0_52 = arith.constant 0 : index
    %c0_53 = arith.constant 0 : index
    %c0_54 = arith.constant 0 : index
    %c0_55 = arith.constant 0 : index
    %35 = vector.load %arg6[%c0_52, %c0_53, %c0_54, %c0_55] : memref<1x4x8x16xf32, #tpu.memory_space<vmem>>, vector<1x3x8x16xf32>
    %36 = vector.shape_cast %35 : vector<1x3x8x16xf32> to vector<3x8x16xf32>
    %37 = arith.addf %36, %34 : vector<3x8x16xf32>
    %c0_56 = arith.constant 0 : index
    %c0_57 = arith.constant 0 : index
    %c0_58 = arith.constant 0 : index
    %c0_59 = arith.constant 0 : index
    %38 = vector.load %arg6[%c0_56, %c0_57, %c0_58, %c0_59] : memref<1x4x8x16xf32, #tpu.memory_space<vmem>>, vector<1x3x8x16xf32>
    %39 = vector.shape_cast %38 : vector<1x3x8x16xf32> to vector<3x8x16xf32>
    %40 = vector.shape_cast %37 : vector<3x8x16xf32> to vector<1x3x8x16xf32>
    tpu.vector_store %arg6[%c0_56, %c0_57, %c0_58, %c0_59], %40 {strides = array<i32>} : memref<1x4x8x16xf32, #tpu.memory_space<vmem>>, vector<1x3x8x16xf32>,
    %c0_60 = arith.constant 0 : index
    %c0_61 = arith.constant 0 : index
    %c0_62 = arith.constant 0 : index
    %c0_63 = arith.constant 0 : index
    %41 = vector.load %arg3[%c0_60, %c0_61, %c0_62, %c0_63] : memref<1x1x10x32xbf16, #tpu.memory_space<vmem>>, vector<1x1x8x32xbf16>
    %42 = vector.shape_cast %41 : vector<1x1x8x32xbf16> to vector<1x8x32xbf16>
    %cst_64 = arith.constant dense<0.000000e+00> : vector<1x8x16xf32>
    %43 = tpu.matmul %42, %31, %cst_64 {dimension_numbers = #tpu.dot_dimension_numbers<[2], [0], [0, 1], [1], [0, 0, 0, 1, 1, 1], [], []>} : vector<1x8x32xbf16>, vector<32x16xbf16>, vector<1x8x16xf32> -> vector<1x8x16xf32>
    %c0_65 = arith.constant 0 : index
    %c3 = arith.constant 3 : index
    %c0_66 = arith.constant 0 : index
    %c0_67 = arith.constant 0 : index
    %44 = vector.load %arg6[%c0_65, %c3, %c0_66, %c0_67] : memref<1x4x8x16xf32, #tpu.memory_space<vmem>>, vector<1x1x8x16xf32>
    %45 = vector.shape_cast %44 : vector<1x1x8x16xf32> to vector<1x8x16xf32>
    %46 = arith.addf %45, %43 : vector<1x8x16xf32>
    %c0_68 = arith.constant 0 : index
    %c3_69 = arith.constant 3 : index
    %c0_70 = arith.constant 0 : index
    %c0_71 = arith.constant 0 : index
    %47 = vector.load %arg6[%c0_68, %c3_69, %c0_70, %c0_71] : memref<1x4x8x16xf32, #tpu.memory_space<vmem>>, vector<1x1x8x16xf32>
    %48 = vector.shape_cast %47 : vector<1x1x8x16xf32> to vector<1x8x16xf32>
    %49 = vector.shape_cast %46 : vector<1x8x16xf32> to vector<1x1x8x16xf32>
    tpu.vector_store %arg6[%c0_68, %c3_69, %c0_70, %c0_71], %49 {strides = array<i32>} : memref<1x4x8x16xf32, #tpu.memory_space<vmem>>, vector<1x1x8x16xf32>,
    %c1_72 = arith.constant 1 : index
    %c1_73 = arith.constant 1 : index
    %c0_74 = arith.constant 0 : index
    %c0_75 = arith.constant 0 : index
    %50 = vector.load %arg5[%c1_72, %c1_73, %c0_74, %c0_75] : memref<3x3x32x16xbf16, #tpu.memory_space<vmem>>, vector<1x1x32x16xbf16>
    %51 = vector.shape_cast %50 : vector<1x1x32x16xbf16> to vector<32x16xbf16>
    %c0_76 = arith.constant 0 : index
    %c1_77 = arith.constant 1 : index
    %c1_78 = arith.constant 1 : index
    %c0_79 = arith.constant 0 : index
    %52 = vector.load %arg2[%c0_76, %c1_77, %c1_78, %c0_79] : memref<1x4x10x32xbf16, #tpu.memory_space<vmem>>, vector<1x3x8x32xbf16>
    %53 = vector.shape_cast %52 : vector<1x3x8x32xbf16> to vector<3x8x32xbf16>
    %cst_80 = arith.constant dense<0.000000e+00> : vector<3x8x16xf32>
    %54 = tpu.matmul %53, %51, %cst_80 {dimension_numbers = #tpu.dot_dimension_numbers<[2], [0], [0, 1], [1], [0, 0, 0, 1, 1, 1], [], []>} : vector<3x8x32xbf16>, vector<32x16xbf16>, vector<3x8x16xf32> -> vector<3x8x16xf32>
    %c0_81 = arith.constant 0 : index
    %c0_82 = arith.constant 0 : index
    %c0_83 = arith.constant 0 : index
    %c0_84 = arith.constant 0 : index
    %55 = vector.load %arg6[%c0_81, %c0_82, %c0_83, %c0_84] : memref<1x4x8x16xf32, #tpu.memory_space<vmem>>, vector<1x3x8x16xf32>
    %56 = vector.shape_cast %55 : vector<1x3x8x16xf32> to vector<3x8x16xf32>
    %57 = arith.addf %56, %54 : vector<3x8x16xf32>
    %c0_85 = arith.constant 0 : index
    %c0_86 = arith.constant 0 : index
    %c0_87 = arith.constant 0 : index
    %c0_88 = arith.constant 0 : index
    %58 = vector.load %arg6[%c0_85, %c0_86, %c0_87, %c0_88] : memref<1x4x8x16xf32, #tpu.memory_space<vmem>>, vector<1x3x8x16xf32>
    %59 = vector.shape_cast %58 : vector<1x3x8x16xf32> to vector<3x8x16xf32>
    %60 = vector.shape_cast %57 : vector<3x8x16xf32> to vector<1x3x8x16xf32>
    tpu.vector_store %arg6[%c0_85, %c0_86, %c0_87, %c0_88], %60 {strides = array<i32>} : memref<1x4x8x16xf32, #tpu.memory_space<vmem>>, vector<1x3x8x16xf32>,
    %c0_89 = arith.constant 0 : index
    %c0_90 = arith.constant 0 : index
    %c1_91 = arith.constant 1 : index
    %c0_92 = arith.constant 0 : index
    %61 = vector.load %arg3[%c0_89, %c0_90, %c1_91, %c0_92] : memref<1x1x10x32xbf16, #tpu.memory_space<vmem>>, vector<1x1x8x32xbf16>
    %62 = vector.shape_cast %61 : vector<1x1x8x32xbf16> to vector<1x8x32xbf16>
    %cst_93 = arith.constant dense<0.000000e+00> : vector<1x8x16xf32>
    %63 = tpu.matmul %62, %51, %cst_93 {dimension_numbers = #tpu.dot_dimension_numbers<[2], [0], [0, 1], [1], [0, 0, 0, 1, 1, 1], [], []>} : vector<1x8x32xbf16>, vector<32x16xbf16>, vector<1x8x16xf32> -> vector<1x8x16xf32>
    %c0_94 = arith.constant 0 : index
    %c3_95 = arith.constant 3 : index
    %c0_96 = arith.constant 0 : index
    %c0_97 = arith.constant 0 : index
    %64 = vector.load %arg6[%c0_94, %c3_95, %c0_96, %c0_97] : memref<1x4x8x16xf32, #tpu.memory_space<vmem>>, vector<1x1x8x16xf32>
    %65 = vector.shape_cast %64 : vector<1x1x8x16xf32> to vector<1x8x16xf32>
    %66 = arith.addf %65, %63 : vector<1x8x16xf32>
    %c0_98 = arith.constant 0 : index
    %c3_99 = arith.constant 3 : index
    %c0_100 = arith.constant 0 : index
    %c0_101 = arith.constant 0 : index
    %67 = vector.load %arg6[%c0_98, %c3_99, %c0_100, %c0_101] : memref<1x4x8x16xf32, #tpu.memory_space<vmem>>, vector<1x1x8x16xf32>
    %68 = vector.shape_cast %67 : vector<1x1x8x16xf32> to vector<1x8x16xf32>
    %69 = vector.shape_cast %66 : vector<1x8x16xf32> to vector<1x1x8x16xf32>
    tpu.vector_store %arg6[%c0_98, %c3_99, %c0_100, %c0_101], %69 {strides = array<i32>} : memref<1x4x8x16xf32, #tpu.memory_space<vmem>>, vector<1x1x8x16xf32>,
    %c1_102 = arith.constant 1 : index
    %c2_103 = arith.constant 2 : index
    %c0_104 = arith.constant 0 : index
    %c0_105 = arith.constant 0 : index
    %70 = vector.load %arg5[%c1_102, %c2_103, %c0_104, %c0_105] : memref<3x3x32x16xbf16, #tpu.memory_space<vmem>>, vector<1x1x32x16xbf16>
    %71 = vector.shape_cast %70 : vector<1x1x32x16xbf16> to vector<32x16xbf16>
    %c0_106 = arith.constant 0 : index
    %c1_107 = arith.constant 1 : index
    %c2_108 = arith.constant 2 : index
    %c0_109 = arith.constant 0 : index
    %72 = vector.load %arg2[%c0_106, %c1_107, %c2_108, %c0_109] : memref<1x4x10x32xbf16, #tpu.memory_space<vmem>>, vector<1x3x8x32xbf16>
    %73 = vector.shape_cast %72 : vector<1x3x8x32xbf16> to vector<3x8x32xbf16>
    %cst_110 = arith.constant dense<0.000000e+00> : vector<3x8x16xf32>
    %74 = tpu.matmul %73, %71, %cst_110 {dimension_numbers = #tpu.dot_dimension_numbers<[2], [0], [0, 1], [1], [0, 0, 0, 1, 1, 1], [], []>} : vector<3x8x32xbf16>, vector<32x16xbf16>, vector<3x8x16xf32> -> vector<3x8x16xf32>
    %c0_111 = arith.constant 0 : index
    %c0_112 = arith.constant 0 : index
    %c0_113 = arith.constant 0 : index
    %c0_114 = arith.constant 0 : index
    %75 = vector.load %arg6[%c0_111, %c0_112, %c0_113, %c0_114] : memref<1x4x8x16xf32, #tpu.memory_space<vmem>>, vector<1x3x8x16xf32>
    %76 = vector.shape_cast %75 : vector<1x3x8x16xf32> to vector<3x8x16xf32>
    %77 = arith.addf %76, %74 : vector<3x8x16xf32>
    %c0_115 = arith.constant 0 : index
    %c0_116 = arith.constant 0 : index
    %c0_117 = arith.constant 0 : index
    %c0_118 = arith.constant 0 : index
    %78 = vector.load %arg6[%c0_115, %c0_116, %c0_117, %c0_118] : memref<1x4x8x16xf32, #tpu.memory_space<vmem>>, vector<1x3x8x16xf32>
    %79 = vector.shape_cast %78 : vector<1x3x8x16xf32> to vector<3x8x16xf32>
    %80 = vector.shape_cast %77 : vector<3x8x16xf32> to vector<1x3x8x16xf32>
    tpu.vector_store %arg6[%c0_115, %c0_116, %c0_117, %c0_118], %80 {strides = array<i32>} : memref<1x4x8x16xf32, #tpu.memory_space<vmem>>, vector<1x3x8x16xf32>,
    %c0_119 = arith.constant 0 : index
    %c0_120 = arith.constant 0 : index
    %c2_121 = arith.constant 2 : index
    %c0_122 = arith.constant 0 : index
    %81 = vector.load %arg3[%c0_119, %c0_120, %c2_121, %c0_122] : memref<1x1x10x32xbf16, #tpu.memory_space<vmem>>, vector<1x1x8x32xbf16>
    %82 = vector.shape_cast %81 : vector<1x1x8x32xbf16> to vector<1x8x32xbf16>
    %cst_123 = arith.constant dense<0.000000e+00> : vector<1x8x16xf32>
    %83 = tpu.matmul %82, %71, %cst_123 {dimension_numbers = #tpu.dot_dimension_numbers<[2], [0], [0, 1], [1], [0, 0, 0, 1, 1, 1], [], []>} : vector<1x8x32xbf16>, vector<32x16xbf16>, vector<1x8x16xf32> -> vector<1x8x16xf32>
    %c0_124 = arith.constant 0 : index
    %c3_125 = arith.constant 3 : index
    %c0_126 = arith.constant 0 : index
    %c0_127 = arith.constant 0 : index
    %84 = vector.load %arg6[%c0_124, %c3_125, %c0_126, %c0_127] : memref<1x4x8x16xf32, #tpu.memory_space<vmem>>, vector<1x1x8x16xf32>
    %85 = vector.shape_cast %84 : vector<1x1x8x16xf32> to vector<1x8x16xf32>
    %86 = arith.addf %85, %83 : vector<1x8x16xf32>
    %c0_128 = arith.constant 0 : index
    %c3_129 = arith.constant 3 : index
    %c0_130 = arith.constant 0 : index
    %c0_131 = arith.constant 0 : index
    %87 = vector.load %arg6[%c0_128, %c3_129, %c0_130, %c0_131] : memref<1x4x8x16xf32, #tpu.memory_space<vmem>>, vector<1x1x8x16xf32>
    %88 = vector.shape_cast %87 : vector<1x1x8x16xf32> to vector<1x8x16xf32>
    %89 = vector.shape_cast %86 : vector<1x8x16xf32> to vector<1x1x8x16xf32>
    tpu.vector_store %arg6[%c0_128, %c3_129, %c0_130, %c0_131], %89 {strides = array<i32>} : memref<1x4x8x16xf32, #tpu.memory_space<vmem>>, vector<1x1x8x16xf32>,
    %c2_132 = arith.constant 2 : index
    %c0_133 = arith.constant 0 : index
    %c0_134 = arith.constant 0 : index
    %c0_135 = arith.constant 0 : index
    %90 = vector.load %arg5[%c2_132, %c0_133, %c0_134, %c0_135] : memref<3x3x32x16xbf16, #tpu.memory_space<vmem>>, vector<1x1x32x16xbf16>
    %91 = vector.shape_cast %90 : vector<1x1x32x16xbf16> to vector<32x16xbf16>
    %c0_136 = arith.constant 0 : index
    %c2_137 = arith.constant 2 : index
    %c0_138 = arith.constant 0 : index
    %c0_139 = arith.constant 0 : index
    %92 = vector.load %arg2[%c0_136, %c2_137, %c0_138, %c0_139] : memref<1x4x10x32xbf16, #tpu.memory_space<vmem>>, vector<1x2x8x32xbf16>
    %93 = vector.shape_cast %92 : vector<1x2x8x32xbf16> to vector<2x8x32xbf16>
    %cst_140 = arith.constant dense<0.000000e+00> : vector<2x8x16xf32>
    %94 = tpu.matmul %93, %91, %cst_140 {dimension_numbers = #tpu.dot_dimension_numbers<[2], [0], [0, 1], [1], [0, 0, 0, 1, 1, 1], [], []>} : vector<2x8x32xbf16>, vector<32x16xbf16>, vector<2x8x16xf32> -> vector<2x8x16xf32>
    %c0_141 = arith.constant 0 : index
    %c0_142 = arith.constant 0 : index
    %c0_143 = arith.constant 0 : index
    %c0_144 = arith.constant 0 : index
    %95 = vector.load %arg6[%c0_141, %c0_142, %c0_143, %c0_144] : memref<1x4x8x16xf32, #tpu.memory_space<vmem>>, vector<1x2x8x16xf32>
    %96 = vector.shape_cast %95 : vector<1x2x8x16xf32> to vector<2x8x16xf32>
    %97 = arith.addf %96, %94 : vector<2x8x16xf32>
    %c0_145 = arith.constant 0 : index
    %c0_146 = arith.constant 0 : index
    %c0_147 = arith.constant 0 : index
    %c0_148 = arith.constant 0 : index
    %98 = vector.load %arg6[%c0_145, %c0_146, %c0_147, %c0_148] : memref<1x4x8x16xf32, #tpu.memory_space<vmem>>, vector<1x2x8x16xf32>
    %99 = vector.shape_cast %98 : vector<1x2x8x16xf32> to vector<2x8x16xf32>
    %100 = vector.shape_cast %97 : vector<2x8x16xf32> to vector<1x2x8x16xf32>
    tpu.vector_store %arg6[%c0_145, %c0_146, %c0_147, %c0_148], %100 {strides = array<i32>} : memref<1x4x8x16xf32, #tpu.memory_space<vmem>>, vector<1x2x8x16xf32>,
    %c0_149 = arith.constant 0 : index
    %c0_150 = arith.constant 0 : index
    %c0_151 = arith.constant 0 : index
    %c0_152 = arith.constant 0 : index
    %101 = vector.load %arg3[%c0_149, %c0_150, %c0_151, %c0_152] : memref<1x1x10x32xbf16, #tpu.memory_space<vmem>>, vector<1x1x8x32xbf16>
    %102 = vector.shape_cast %101 : vector<1x1x8x32xbf16> to vector<1x8x32xbf16>
    %cst_153 = arith.constant dense<0.000000e+00> : vector<1x8x16xf32>
    %103 = tpu.matmul %102, %91, %cst_153 {dimension_numbers = #tpu.dot_dimension_numbers<[2], [0], [0, 1], [1], [0, 0, 0, 1, 1, 1], [], []>} : vector<1x8x32xbf16>, vector<32x16xbf16>, vector<1x8x16xf32> -> vector<1x8x16xf32>
    %c0_154 = arith.constant 0 : index
    %c2_155 = arith.constant 2 : index
    %c0_156 = arith.constant 0 : index
    %c0_157 = arith.constant 0 : index
    %104 = vector.load %arg6[%c0_154, %c2_155, %c0_156, %c0_157] : memref<1x4x8x16xf32, #tpu.memory_space<vmem>>, vector<1x1x8x16xf32>
    %105 = vector.shape_cast %104 : vector<1x1x8x16xf32> to vector<1x8x16xf32>
    %106 = arith.addf %105, %103 : vector<1x8x16xf32>
    %c0_158 = arith.constant 0 : index
    %c2_159 = arith.constant 2 : index
    %c0_160 = arith.constant 0 : index
    %c0_161 = arith.constant 0 : index
    %107 = vector.load %arg6[%c0_158, %c2_159, %c0_160, %c0_161] : memref<1x4x8x16xf32, #tpu.memory_space<vmem>>, vector<1x1x8x16xf32>
    %108 = vector.shape_cast %107 : vector<1x1x8x16xf32> to vector<1x8x16xf32>
    %109 = vector.shape_cast %106 : vector<1x8x16xf32> to vector<1x1x8x16xf32>
    tpu.vector_store %arg6[%c0_158, %c2_159, %c0_160, %c0_161], %109 {strides = array<i32>} : memref<1x4x8x16xf32, #tpu.memory_space<vmem>>, vector<1x1x8x16xf32>,
    %c0_162 = arith.constant 0 : index
    %c0_163 = arith.constant 0 : index
    %c0_164 = arith.constant 0 : index
    %c0_165 = arith.constant 0 : index
    %110 = vector.load %arg4[%c0_162, %c0_163, %c0_164, %c0_165] : memref<1x1x10x32xbf16, #tpu.memory_space<vmem>>, vector<1x1x8x32xbf16>
    %111 = vector.shape_cast %110 : vector<1x1x8x32xbf16> to vector<1x8x32xbf16>
    %cst_166 = arith.constant dense<0.000000e+00> : vector<1x8x16xf32>
    %112 = tpu.matmul %111, %91, %cst_166 {dimension_numbers = #tpu.dot_dimension_numbers<[2], [0], [0, 1], [1], [0, 0, 0, 1, 1, 1], [], []>} : vector<1x8x32xbf16>, vector<32x16xbf16>, vector<1x8x16xf32> -> vector<1x8x16xf32>
    %c0_167 = arith.constant 0 : index
    %c3_168 = arith.constant 3 : index
    %c0_169 = arith.constant 0 : index
    %c0_170 = arith.constant 0 : index
    %113 = vector.load %arg6[%c0_167, %c3_168, %c0_169, %c0_170] : memref<1x4x8x16xf32, #tpu.memory_space<vmem>>, vector<1x1x8x16xf32>
    %114 = vector.shape_cast %113 : vector<1x1x8x16xf32> to vector<1x8x16xf32>
    %115 = arith.addf %114, %112 : vector<1x8x16xf32>
    %c0_171 = arith.constant 0 : index
    %c3_172 = arith.constant 3 : index
    %c0_173 = arith.constant 0 : index
    %c0_174 = arith.constant 0 : index
    %116 = vector.load %arg6[%c0_171, %c3_172, %c0_173, %c0_174] : memref<1x4x8x16xf32, #tpu.memory_space<vmem>>, vector<1x1x8x16xf32>
    %117 = vector.shape_cast %116 : vector<1x1x8x16xf32> to vector<1x8x16xf32>
    %118 = vector.shape_cast %115 : vector<1x8x16xf32> to vector<1x1x8x16xf32>
    tpu.vector_store %arg6[%c0_171, %c3_172, %c0_173, %c0_174], %118 {strides = array<i32>} : memref<1x4x8x16xf32, #tpu.memory_space<vmem>>, vector<1x1x8x16xf32>,
    %c2_175 = arith.constant 2 : index
    %c1_176 = arith.constant 1 : index
    %c0_177 = arith.constant 0 : index
    %c0_178 = arith.constant 0 : index
    %119 = vector.load %arg5[%c2_175, %c1_176, %c0_177, %c0_178] : memref<3x3x32x16xbf16, #tpu.memory_space<vmem>>, vector<1x1x32x16xbf16>
    %120 = vector.shape_cast %119 : vector<1x1x32x16xbf16> to vector<32x16xbf16>
    %c0_179 = arith.constant 0 : index
    %c2_180 = arith.constant 2 : index
    %c1_181 = arith.constant 1 : index
    %c0_182 = arith.constant 0 : index
    %121 = vector.load %arg2[%c0_179, %c2_180, %c1_181, %c0_182] : memref<1x4x10x32xbf16, #tpu.memory_space<vmem>>, vector<1x2x8x32xbf16>
    %122 = vector.shape_cast %121 : vector<1x2x8x32xbf16> to vector<2x8x32xbf16>
    %cst_183 = arith.constant dense<0.000000e+00> : vector<2x8x16xf32>
    %123 = tpu.matmul %122, %120, %cst_183 {dimension_numbers = #tpu.dot_dimension_numbers<[2], [0], [0, 1], [1], [0, 0, 0, 1, 1, 1], [], []>} : vector<2x8x32xbf16>, vector<32x16xbf16>, vector<2x8x16xf32> -> vector<2x8x16xf32>
    %c0_184 = arith.constant 0 : index
    %c0_185 = arith.constant 0 : index
    %c0_186 = arith.constant 0 : index
    %c0_187 = arith.constant 0 : index
    %124 = vector.load %arg6[%c0_184, %c0_185, %c0_186, %c0_187] : memref<1x4x8x16xf32, #tpu.memory_space<vmem>>, vector<1x2x8x16xf32>
    %125 = vector.shape_cast %124 : vector<1x2x8x16xf32> to vector<2x8x16xf32>
    %126 = arith.addf %125, %123 : vector<2x8x16xf32>
    %c0_188 = arith.constant 0 : index
    %c0_189 = arith.constant 0 : index
    %c0_190 = arith.constant 0 : index
    %c0_191 = arith.constant 0 : index
    %127 = vector.load %arg6[%c0_188, %c0_189, %c0_190, %c0_191] : memref<1x4x8x16xf32, #tpu.memory_space<vmem>>, vector<1x2x8x16xf32>
    %128 = vector.shape_cast %127 : vector<1x2x8x16xf32> to vector<2x8x16xf32>
    %129 = vector.shape_cast %126 : vector<2x8x16xf32> to vector<1x2x8x16xf32>
    tpu.vector_store %arg6[%c0_188, %c0_189, %c0_190, %c0_191], %129 {strides = array<i32>} : memref<1x4x8x16xf32, #tpu.memory_space<vmem>>, vector<1x2x8x16xf32>,
    %c0_192 = arith.constant 0 : index
    %c0_193 = arith.constant 0 : index
    %c1_194 = arith.constant 1 : index
    %c0_195 = arith.constant 0 : index
    %130 = vector.load %arg3[%c0_192, %c0_193, %c1_194, %c0_195] : memref<1x1x10x32xbf16, #tpu.memory_space<vmem>>, vector<1x1x8x32xbf16>
    %131 = vector.shape_cast %130 : vector<1x1x8x32xbf16> to vector<1x8x32xbf16>
    %cst_196 = arith.constant dense<0.000000e+00> : vector<1x8x16xf32>
    %132 = tpu.matmul %131, %120, %cst_196 {dimension_numbers = #tpu.dot_dimension_numbers<[2], [0], [0, 1], [1], [0, 0, 0, 1, 1, 1], [], []>} : vector<1x8x32xbf16>, vector<32x16xbf16>, vector<1x8x16xf32> -> vector<1x8x16xf32>
    %c0_197 = arith.constant 0 : index
    %c2_198 = arith.constant 2 : index
    %c0_199 = arith.constant 0 : index
    %c0_200 = arith.constant 0 : index
    %133 = vector.load %arg6[%c0_197, %c2_198, %c0_199, %c0_200] : memref<1x4x8x16xf32, #tpu.memory_space<vmem>>, vector<1x1x8x16xf32>
    %134 = vector.shape_cast %133 : vector<1x1x8x16xf32> to vector<1x8x16xf32>
    %135 = arith.addf %134, %132 : vector<1x8x16xf32>
    %c0_201 = arith.constant 0 : index
    %c2_202 = arith.constant 2 : index
    %c0_203 = arith.constant 0 : index
    %c0_204 = arith.constant 0 : index
    %136 = vector.load %arg6[%c0_201, %c2_202, %c0_203, %c0_204] : memref<1x4x8x16xf32, #tpu.memory_space<vmem>>, vector<1x1x8x16xf32>
    %137 = vector.shape_cast %136 : vector<1x1x8x16xf32> to vector<1x8x16xf32>
    %138 = vector.shape_cast %135 : vector<1x8x16xf32> to vector<1x1x8x16xf32>
    tpu.vector_store %arg6[%c0_201, %c2_202, %c0_203, %c0_204], %138 {strides = array<i32>} : memref<1x4x8x16xf32, #tpu.memory_space<vmem>>, vector<1x1x8x16xf32>,
    %c0_205 = arith.constant 0 : index
    %c0_206 = arith.constant 0 : index
    %c1_207 = arith.constant 1 : index
    %c0_208 = arith.constant 0 : index
    %139 = vector.load %arg4[%c0_205, %c0_206, %c1_207, %c0_208] : memref<1x1x10x32xbf16, #tpu.memory_space<vmem>>, vector<1x1x8x32xbf16>
    %140 = vector.shape_cast %139 : vector<1x1x8x32xbf16> to vector<1x8x32xbf16>
    %cst_209 = arith.constant dense<0.000000e+00> : vector<1x8x16xf32>
    %141 = tpu.matmul %140, %120, %cst_209 {dimension_numbers = #tpu.dot_dimension_numbers<[2], [0], [0, 1], [1], [0, 0, 0, 1, 1, 1], [], []>} : vector<1x8x32xbf16>, vector<32x16xbf16>, vector<1x8x16xf32> -> vector<1x8x16xf32>
    %c0_210 = arith.constant 0 : index
    %c3_211 = arith.constant 3 : index
    %c0_212 = arith.constant 0 : index
    %c0_213 = arith.constant 0 : index
    %142 = vector.load %arg6[%c0_210, %c3_211, %c0_212, %c0_213] : memref<1x4x8x16xf32, #tpu.memory_space<vmem>>, vector<1x1x8x16xf32>
    %143 = vector.shape_cast %142 : vector<1x1x8x16xf32> to vector<1x8x16xf32>
    %144 = arith.addf %143, %141 : vector<1x8x16xf32>
    %c0_214 = arith.constant 0 : index
    %c3_215 = arith.constant 3 : index
    %c0_216 = arith.constant 0 : index
    %c0_217 = arith.constant 0 : index
    %145 = vector.load %arg6[%c0_214, %c3_215, %c0_216, %c0_217] : memref<1x4x8x16xf32, #tpu.memory_space<vmem>>, vector<1x1x8x16xf32>
    %146 = vector.shape_cast %145 : vector<1x1x8x16xf32> to vector<1x8x16xf32>
    %147 = vector.shape_cast %144 : vector<1x8x16xf32> to vector<1x1x8x16xf32>
    tpu.vector_store %arg6[%c0_214, %c3_215, %c0_216, %c0_217], %147 {strides = array<i32>} : memref<1x4x8x16xf32, #tpu.memory_space<vmem>>, vector<1x1x8x16xf32>,
    %c2_218 = arith.constant 2 : index
    %c2_219 = arith.constant 2 : index
    %c0_220 = arith.constant 0 : index
    %c0_221 = arith.constant 0 : index
    %148 = vector.load %arg5[%c2_218, %c2_219, %c0_220, %c0_221] : memref<3x3x32x16xbf16, #tpu.memory_space<vmem>>, vector<1x1x32x16xbf16>
    %149 = vector.shape_cast %148 : vector<1x1x32x16xbf16> to vector<32x16xbf16>
    %c0_222 = arith.constant 0 : index
    %c2_223 = arith.constant 2 : index
    %c2_224 = arith.constant 2 : index
    %c0_225 = arith.constant 0 : index
    %150 = vector.load %arg2[%c0_222, %c2_223, %c2_224, %c0_225] : memref<1x4x10x32xbf16, #tpu.memory_space<vmem>>, vector<1x2x8x32xbf16>
    %151 = vector.shape_cast %150 : vector<1x2x8x32xbf16> to vector<2x8x32xbf16>
    %cst_226 = arith.constant dense<0.000000e+00> : vector<2x8x16xf32>
    %152 = tpu.matmul %151, %149, %cst_226 {dimension_numbers = #tpu.dot_dimension_numbers<[2], [0], [0, 1], [1], [0, 0, 0, 1, 1, 1], [], []>} : vector<2x8x32xbf16>, vector<32x16xbf16>, vector<2x8x16xf32> -> vector<2x8x16xf32>
    %c0_227 = arith.constant 0 : index
    %c0_228 = arith.constant 0 : index
    %c0_229 = arith.constant 0 : index
    %c0_230 = arith.constant 0 : index
    %153 = vector.load %arg6[%c0_227, %c0_228, %c0_229, %c0_230] : memref<1x4x8x16xf32, #tpu.memory_space<vmem>>, vector<1x2x8x16xf32>
    %154 = vector.shape_cast %153 : vector<1x2x8x16xf32> to vector<2x8x16xf32>
    %155 = arith.addf %154, %152 : vector<2x8x16xf32>
    %c0_231 = arith.constant 0 : index
    %c0_232 = arith.constant 0 : index
    %c0_233 = arith.constant 0 : index
    %c0_234 = arith.constant 0 : index
    %156 = vector.load %arg6[%c0_231, %c0_232, %c0_233, %c0_234] : memref<1x4x8x16xf32, #tpu.memory_space<vmem>>, vector<1x2x8x16xf32>
    %157 = vector.shape_cast %156 : vector<1x2x8x16xf32> to vector<2x8x16xf32>
    %158 = vector.shape_cast %155 : vector<2x8x16xf32> to vector<1x2x8x16xf32>
    tpu.vector_store %arg6[%c0_231, %c0_232, %c0_233, %c0_234], %158 {strides = array<i32>} : memref<1x4x8x16xf32, #tpu.memory_space<vmem>>, vector<1x2x8x16xf32>,
    %c0_235 = arith.constant 0 : index
    %c0_236 = arith.constant 0 : index
    %c2_237 = arith.constant 2 : index
    %c0_238 = arith.constant 0 : index
    %159 = vector.load %arg3[%c0_235, %c0_236, %c2_237, %c0_238] : memref<1x1x10x32xbf16, #tpu.memory_space<vmem>>, vector<1x1x8x32xbf16>
    %160 = vector.shape_cast %159 : vector<1x1x8x32xbf16> to vector<1x8x32xbf16>
    %cst_239 = arith.constant dense<0.000000e+00> : vector<1x8x16xf32>
    %161 = tpu.matmul %160, %149, %cst_239 {dimension_numbers = #tpu.dot_dimension_numbers<[2], [0], [0, 1], [1], [0, 0, 0, 1, 1, 1], [], []>} : vector<1x8x32xbf16>, vector<32x16xbf16>, vector<1x8x16xf32> -> vector<1x8x16xf32>
    %c0_240 = arith.constant 0 : index
    %c2_241 = arith.constant 2 : index
    %c0_242 = arith.constant 0 : index
    %c0_243 = arith.constant 0 : index
    %162 = vector.load %arg6[%c0_240, %c2_241, %c0_242, %c0_243] : memref<1x4x8x16xf32, #tpu.memory_space<vmem>>, vector<1x1x8x16xf32>
    %163 = vector.shape_cast %162 : vector<1x1x8x16xf32> to vector<1x8x16xf32>
    %164 = arith.addf %163, %161 : vector<1x8x16xf32>
    %c0_244 = arith.constant 0 : index
    %c2_245 = arith.constant 2 : index
    %c0_246 = arith.constant 0 : index
    %c0_247 = arith.constant 0 : index
    %165 = vector.load %arg6[%c0_244, %c2_245, %c0_246, %c0_247] : memref<1x4x8x16xf32, #tpu.memory_space<vmem>>, vector<1x1x8x16xf32>
    %166 = vector.shape_cast %165 : vector<1x1x8x16xf32> to vector<1x8x16xf32>
    %167 = vector.shape_cast %164 : vector<1x8x16xf32> to vector<1x1x8x16xf32>
    tpu.vector_store %arg6[%c0_244, %c2_245, %c0_246, %c0_247], %167 {strides = array<i32>} : memref<1x4x8x16xf32, #tpu.memory_space<vmem>>, vector<1x1x8x16xf32>,
    %c0_248 = arith.constant 0 : index
    %c0_249 = arith.constant 0 : index
    %c2_250 = arith.constant 2 : index
    %c0_251 = arith.constant 0 : index
    %168 = vector.load %arg4[%c0_248, %c0_249, %c2_250, %c0_251] : memref<1x1x10x32xbf16, #tpu.memory_space<vmem>>, vector<1x1x8x32xbf16>
    %169 = vector.shape_cast %168 : vector<1x1x8x32xbf16> to vector<1x8x32xbf16>
    %cst_252 = arith.constant dense<0.000000e+00> : vector<1x8x16xf32>
    %170 = tpu.matmul %169, %149, %cst_252 {dimension_numbers = #tpu.dot_dimension_numbers<[2], [0], [0, 1], [1], [0, 0, 0, 1, 1, 1], [], []>} : vector<1x8x32xbf16>, vector<32x16xbf16>, vector<1x8x16xf32> -> vector<1x8x16xf32>
    %c0_253 = arith.constant 0 : index
    %c3_254 = arith.constant 3 : index
    %c0_255 = arith.constant 0 : index
    %c0_256 = arith.constant 0 : index
    %171 = vector.load %arg6[%c0_253, %c3_254, %c0_255, %c0_256] : memref<1x4x8x16xf32, #tpu.memory_space<vmem>>, vector<1x1x8x16xf32>
    %172 = vector.shape_cast %171 : vector<1x1x8x16xf32> to vector<1x8x16xf32>
    %173 = arith.addf %172, %170 : vector<1x8x16xf32>
    %c0_257 = arith.constant 0 : index
    %c3_258 = arith.constant 3 : index
    %c0_259 = arith.constant 0 : index
    %c0_260 = arith.constant 0 : index
    %174 = vector.load %arg6[%c0_257, %c3_258, %c0_259, %c0_260] : memref<1x4x8x16xf32, #tpu.memory_space<vmem>>, vector<1x1x8x16xf32>
    %175 = vector.shape_cast %174 : vector<1x1x8x16xf32> to vector<1x8x16xf32>
    %176 = vector.shape_cast %173 : vector<1x8x16xf32> to vector<1x1x8x16xf32>
    tpu.vector_store %arg6[%c0_257, %c3_258, %c0_259, %c0_260], %176 {strides = array<i32>} : memref<1x4x8x16xf32, #tpu.memory_space<vmem>>, vector<1x1x8x16xf32>,
    return
  }
  func.func @transform_0(%arg0: i32, %arg1: i32) -> (i32, i32, i32, i32) {
    %c0_i32 = arith.constant 0 : i32
    %c0_i32_0 = arith.constant 0 : i32
    %c0_i32_1 = arith.constant 0 : i32
    return %arg0, %arg1, %c0_i32, %c0_i32_0 : i32, i32, i32, i32
  }
  func.func @transform_1(%arg0: i32, %arg1: i32) -> (i32, i32, i32, i32) {
    %c1_i32 = arith.constant 1 : i32
    %0 = arith.addi %arg1, %c1_i32 : i32
    %c4_i32 = arith.constant 4 : i32
    %1 = arith.muli %0, %c4_i32 : i32
    %c0_i32 = arith.constant 0 : i32
    %c0_i32_0 = arith.constant 0 : i32
    %c0_i32_1 = arith.constant 0 : i32
    return %arg0, %1, %c0_i32, %c0_i32_0 : i32, i32, i32, i32
  }
  func.func @transform_2(%arg0: i32, %arg1: i32) -> (i32, i32, i32, i32) {
    %c1_i32 = arith.constant 1 : i32
    %0 = arith.addi %arg1, %c1_i32 : i32
    %c4_i32 = arith.constant 4 : i32
    %1 = arith.muli %0, %c4_i32 : i32
    %c1_i32_0 = arith.constant 1 : i32
    %2 = arith.addi %1, %c1_i32_0 : i32
    %c0_i32 = arith.constant 0 : i32
    %c0_i32_1 = arith.constant 0 : i32
    %c0_i32_2 = arith.constant 0 : i32
    return %arg0, %2, %c0_i32, %c0_i32_1 : i32, i32, i32, i32
  }
  func.func @transform_3(%arg0: i32, %arg1: i32) -> (i32, i32, i32, i32) {
    %c0_i32 = arith.constant 0 : i32
    %c0_i32_0 = arith.constant 0 : i32
    %c0_i32_1 = arith.constant 0 : i32
    %c0_i32_2 = arith.constant 0 : i32
    %c0_i32_3 = arith.constant 0 : i32
    return %c0_i32, %c0_i32_0, %c0_i32_1, %c0_i32_2 : i32, i32, i32, i32
  }
  func.func @transform_4(%arg0: i32, %arg1: i32) -> (i32, i32, i32, i32) {
    %c0_i32 = arith.constant 0 : i32
    %c0_i32_0 = arith.constant 0 : i32
    %c0_i32_1 = arith.constant 0 : i32
    return %arg0, %arg1, %c0_i32, %c0_i32_0 : i32, i32, i32, i32
  }
}

</mosaic_0001>

<llo_original>
// kernel: _downsample_forward.1
$region0: #{_downsample_forward.1}
  #allocation0 [shape = 'u32[]', space=smem, size = 0x4, offset = 0x4, fixed_abs, tag = 'smem constant byte address 0x4 - core index']
  #allocation1 [shape = 'u32[72,128]{1,0:T(1,128)}', space=vmem, size = 0x9000, scoped, tag = 'internal scratch']
  %s0 = inlined_call_operand.vmem [shape: bf16[2,10,10,32], index: 0, kind: input, shape index: {}, may-alias: {0,1,2}]
  %s1 = inlined_call_operand.vmem [shape: bf16[2,10,10,32], index: 1, kind: input, shape index: {}, may-alias: {0,1,2}]
  %s2 = inlined_call_operand.vmem [shape: bf16[2,10,10,32], index: 2, kind: input, shape index: {}, may-alias: {0,1,2}]
  %s3 = inlined_call_operand.vmem [shape: bf16[3,3,32,16], index: 3, kind: input, shape index: {}]
  %s4 = inlined_call_operand.hbm [shape: f32[2,8,8,16], index: 4, kind: output, shape index: {}]
  %s5 = sld [smem:[#allocation0]]
  $region49: #{_downsample_forward.1} parent=0
    _
  %s7 = ssub.s32 1, %s5
  %s8 = scalar_select 0, %s7, %s5
  $region1: #{_downsample_forward.1} parent=0
    #allocation2 [shape = 'u8[32768]{0}', space=vmem, size = 0x8000, scoped, tag = 'output window, operand 0']
    #allocation3 [shape = 's32[2]{0}', space=sflag, size = 0x8, scoped, tag = 'scoped memory for _downsample_forward.1']
    %9 = vsyncpa [#allocation3], 0
    %s10 = scalar_lea.sflag [#allocation3], 1
    %11 = vsyncpa %s10, 0
    loop: start=0, step=1, limit=6
    $region2: #{_downsample_forward.1} parent=1 // loop_pre_header
      _
    $region3: #{_downsample_forward.1} parent=1 // loop_header
      %s13 = sphi 0, %s17
      %p14 = scmp.ge.s32.totalorder %s13, 6
      %s20 = sphi 0, %s32
      %s21 = sphi 0, %s28
      %s22 = sphi 0, %s20
      %s23 = sphi 0, %s21
      %s24 = sphi 0, %s22
      %s25 = sphi 0, %s23
      %s37 = sphi 0, %s39
      %s40 = sphi 0, %s37
      %s41 = sphi 0, %s40
      %s57 = sphi 0, %s41
      %s69 = sphi 0, %s71
      %s72 = sphi 0, %s69
      %s73 = sphi 0, %s72
      %s89 = sphi 0, %s73
      %s103 = sphi 0, %s105
      %s106 = sphi 0, %s103
      %s107 = sphi 0, %s106
      %s123 = sphi 0, %s107
      %s127 = sphi 0, %s127
      %s129 = sphi 0, %s127
      %s130 = sphi 0, %s129
      %s144 = sphi 0, %s130
      %s152 = sphi 0, %s154
      %s155 = sphi 0, %s152
      %s156 = sphi 0, %s155
      %s172 = sphi 0, %s156
    $region4: #{_downsample_forward.1} parent=1 // loop_header_branch
      %16 = sbr.rel (%p14) target = $region8
    $region5: #{_downsample_forward.1} parent=1 // loop_body
      %s18 = ssub.s32 %s13, 1
      %s19 = ssub.s32 %s13, 2
      %s26 = sadd.s32 1, %s21
      %p27 = scmp.ge.s32.totalorder %s26, 2
      %s28 = scalar_select %p27, 0, %s26
      %s29 = sadd.s32 1, %s20
      %s30 = scalar_select %p27, %s29, %s20
      %p31 = scmp.ge.s32.totalorder %s30, 2
      %s32 = scalar_select %p31, 0, %s30
      %s33 = ssub.s32 %s20, %s32
      %s34 = ssub.s32 %s21, %s28
      %s35 = sor.u32 %s33, %s34
      %p36 = scmp.eq.s32.totalorder %s35, 0
      %s38 = sadd.s32 %s37, 1
      %s39 = scalar_select %p36, %s37, %s38
      %p42 = pneg %p36
      %p43 = scmp.eq.s32.totalorder %s13, 3
      %p44 = por %p42, %p43
      %p45 = scmp.ne.s32.totalorder %s37, %s40
      %p46 = scmp.eq.s32.totalorder %s13, 0
      %p47 = por %p45, %p46
      %p48 = scmp.ne.s32.totalorder %s37, %s40
      %p49 = scmp.eq.s32.totalorder %s18, 3
      %p50 = por %p48, %p49
      %p51 = scmp.ne.s32.totalorder %s40, %s41
      %p52 = scmp.eq.s32.totalorder %s18, 0
      %p53 = por %p51, %p52
      %p54 = scmp.ne.s32.totalorder %s40, %s41
      %p55 = scmp.eq.s32.totalorder %s19, 3
      %p56 = por %p54, %p55
      %p58 = scmp.ne.s32.totalorder %s41, %s57
      %p59 = scmp.eq.s32.totalorder %s19, 0
      %p60 = por %p58, %p59
      %s61 = sadd.s32 %s21, 1
      %s62 = smul.u32 %s61, 4
      %s63 = sadd.s32 %s28, 1
      %s64 = smul.u32 %s63, 4
      %s65 = ssub.s32 %s20, %s32
      %s66 = ssub.s32 %s62, %s64
      %s67 = sor.u32 %s65, %s66
      %p68 = scmp.eq.s32.totalorder %s67, 0
      %s70 = sadd.s32 %s69, 1
      %s71 = scalar_select %p68, %s69, %s70
      %p74 = pneg %p68
      %p75 = scmp.eq.s32.totalorder %s13, 3
      %p76 = por %p74, %p75
      %p77 = scmp.ne.s32.totalorder %s69, %s72
      %p78 = scmp.eq.s32.totalorder %s13, 0
      %p79 = por %p77, %p78
      %p80 = scmp.ne.s32.totalorder %s69, %s72
      %p81 = scmp.eq.s32.totalorder %s18, 3
      %p82 = por %p80, %p81
      %p83 = scmp.ne.s32.totalorder %s72, %s73
      %p84 = scmp.eq.s32.totalorder %s18, 0
      %p85 = por %p83, %p84
      %p86 = scmp.ne.s32.totalorder %s72, %s73
      %p87 = scmp.eq.s32.totalorder %s19, 3
      %p88 = por %p86, %p87
      %p90 = scmp.ne.s32.totalorder %s73, %s89
      %p91 = scmp.eq.s32.totalorder %s19, 0
      %p92 = por %p90, %p91
      %s93 = sadd.s32 %s21, 1
      %s94 = smul.u32 %s93, 4
      %s95 = sadd.s32 %s94, 1
      %s96 = sadd.s32 %s28, 1
      %s97 = smul.u32 %s96, 4
      %s98 = sadd.s32 %s97, 1
      %s99 = ssub.s32 %s20, %s32
      %s100 = ssub.s32 %s95, %s98
      %s101 = sor.u32 %s99, %s100
      %p102 = scmp.eq.s32.totalorder %s101, 0
      %s104 = sadd.s32 %s103, 1
      %s105 = scalar_select %p102, %s103, %s104
      %p108 = pneg %p102
      %p109 = scmp.eq.s32.totalorder %s13, 3
      %p110 = por %p108, %p109
      %p111 = scmp.ne.s32.totalorder %s103, %s106
      %p112 = scmp.eq.s32.totalorder %s13, 0
      %p113 = por %p111, %p112
      %p114 = scmp.ne.s32.totalorder %s103, %s106
      %p115 = scmp.eq.s32.totalorder %s18, 3
      %p116 = por %p114, %p115
      %p117 = scmp.ne.s32.totalorder %s106, %s107
      %p118 = scmp.eq.s32.totalorder %s18, 0
      %p119 = por %p117, %p118
      %p120 = scmp.ne.s32.totalorder %s106, %s107
      %p121 = scmp.eq.s32.totalorder %s19, 3
      %p122 = por %p120, %p121
      %p124 = scmp.ne.s32.totalorder %s107, %s123
      %p125 = scmp.eq.s32.totalorder %s19, 0
      %p126 = por %p124, %p125
      %s128 = sadd.s32 %s127, 1
      %p131 = scmp.eq.s32.totalorder %s13, 3
      %p132 = scmp.ne.s32.totalorder %s127, %s129
      %p133 = scmp.eq.s32.totalorder %s13, 0
      %p134 = por %p132, %p133
      %p135 = scmp.ne.s32.totalorder %s127, %s129
      %p136 = scmp.eq.s32.totalorder %s18, 3
      %p137 = por %p135, %p136
      %p138 = scmp.ne.s32.totalorder %s129, %s130
      %p139 = scmp.eq.s32.totalorder %s18, 0
      %p140 = por %p138, %p139
      %p141 = scmp.ne.s32.totalorder %s129, %s130
      %p142 = scmp.eq.s32.totalorder %s19, 3
      %p143 = por %p141, %p142
      %p145 = scmp.ne.s32.totalorder %s130, %s144
      %p146 = scmp.eq.s32.totalorder %s19, 0
      %p147 = por %p145, %p146
      %s148 = ssub.s32 %s20, %s32
      %s149 = ssub.s32 %s21, %s28
      %s150 = sor.u32 %s148, %s149
      %p151 = scmp.eq.s32.totalorder %s150, 0
      %s153 = sadd.s32 %s152, 1
      %s154 = scalar_select %p151, %s152, %s153
      %p157 = pneg %p151
      %p158 = scmp.eq.s32.totalorder %s13, 3
      %p159 = por %p157, %p158
      %p160 = scmp.ne.s32.totalorder %s152, %s155
      %p161 = scmp.eq.s32.totalorder %s13, 0
      %p162 = por %p160, %p161
      %p163 = scmp.ne.s32.totalorder %s152, %s155
      %p164 = scmp.eq.s32.totalorder %s18, 3
      %p165 = por %p163, %p164
      %p166 = scmp.ne.s32.totalorder %s155, %s156
      %p167 = scmp.eq.s32.totalorder %s18, 0
      %p168 = por %p166, %p167
      %p169 = scmp.ne.s32.totalorder %s155, %s156
      %p170 = scmp.eq.s32.totalorder %s19, 3
      %p171 = por %p169, %p170
      %p173 = scmp.ne.s32.totalorder %s156, %s172
      %p174 = scmp.eq.s32.totalorder %s19, 0
      %p175 = por %p173, %p174
      %p176 = scmp.le.s32.totalorder 1, %s13
      %p177 = scmp.lt.s32.totalorder %s13, 5
      %p178 = pnand %p176, %p177
      %p179 = pneg %p178
      // Predicated region
      $region9: #{_downsample_forward.1} parent=5 // pred_check
        _
      $region10: #{_downsample_forward.1} parent=5 // pred_check_branch
        %181 = sbr.rel (%p178) target = $region12
      $region11: #{_downsample_forward.1} parent=5 // pred_region
        %s182 = ssub.s32 %s13, 1
        // Predicated region
        $region13: #{_downsample_forward.1} parent=11 // pred_check
          %p183 = pneg %p140
        $region14: #{_downsample_forward.1} parent=11 // pred_check_branch
          %185 = sbr.rel (%p183) target = $region16
        $region15: #{_downsample_forward.1} parent=11 // pred_region
          _
        $region16: #{_downsample_forward.1} parent=11 // pred_fallthru
          _
      $region12: #{_downsample_forward.1} parent=5 // pred_fallthru
        _
      %p186 = scmp.lt.s32.totalorder %s13, 4
      // Predicated region
      $region17: #{_downsample_forward.1} parent=5 // pred_check
        %p187 = pneg %p186
      $region18: #{_downsample_forward.1} parent=5 // pred_check_branch
        %189 = sbr.rel (%p187) target = $region20
      $region19: #{_downsample_forward.1} parent=5 // pred_region
        // Predicated region
        $region21: #{_downsample_forward.1} parent=19 // pred_check
          %p190 = pneg %p47
        $region22: #{_downsample_forward.1} parent=19 // pred_check_branch
          %192 = sbr.rel (%p190) target = $region24
        $region23: #{_downsample_forward.1} parent=19 // pred_region
          %s193 = smul.u32 4, %s21
          %s194 = ssub.s32 10, %s193
          %p195 = scmp.lt.s32.totalorder %s194, 4
          %s196 = scalar_select %p195, %s194, 4
          %s197 = smul.u32 4, %s196
          %s198 = smul.u32 %s197, 2
          %p199 = scmp.lt.s32.totalorder %s20, 1
          %s200 = scalar_select %p199, %s20, 1
          %p201 = scmp.lt.s32.totalorder %s193, 9
          %s202 = scalar_select %p201, %s193, 9
          %s203 = smul.addr %s202, 2
          %s204 = smul.addr %s200, 20
          %s205 = sadd.s32 %s203, %s204
          %s206 = smul.addr %s205, 4
          %s207 = scalar_lea.vmem %s0, %s206
          %s208 = smul.u32 4, %s21
          %s209 = ssub.s32 10, %s208
          %p210 = scmp.lt.s32.totalorder %s209, 4
          %s211 = scalar_select %p210, %s209, 4
          %s212 = smul.u32 4, %s211
          %s213 = smul.u32 %s212, 2
        $region24: #{_downsample_forward.1} parent=19 // pred_fallthru
          _
        // Predicated region
        $region25: #{_downsample_forward.1} parent=19 // pred_check
          %p214 = pneg %p79
        $region26: #{_downsample_forward.1} parent=19 // pred_check_branch
          %216 = sbr.rel (%p214) target = $region28
        $region27: #{_downsample_forward.1} parent=19 // pred_region
          %s217 = sadd.s32 %s21, 1
          %s218 = smul.u32 %s217, 4
          %p219 = scmp.lt.s32.totalorder %s20, 1
          %s220 = scalar_select %p219, %s20, 1
          %p221 = scmp.lt.s32.totalorder %s218, 9
          %s222 = scalar_select %p221, %s218, 9
          %s223 = smul.addr %s222, 2
          %s224 = smul.addr %s220, 20
          %s225 = sadd.s32 %s223, %s224
          %s226 = smul.addr %s225, 4
          %s227 = scalar_lea.vmem %s1, %s226
          %s228 = sadd.s32 %s21, 1
          %s229 = smul.u32 %s228, 4
        $region28: #{_downsample_forward.1} parent=19 // pred_fallthru
          _
        // Predicated region
        $region29: #{_downsample_forward.1} parent=19 // pred_check
          %p230 = pneg %p113
        $region30: #{_downsample_forward.1} parent=19 // pred_check_branch
          %232 = sbr.rel (%p230) target = $region32
        $region31: #{_downsample_forward.1} parent=19 // pred_region
          %s233 = sadd.s32 %s21, 1
          %s234 = smul.u32 %s233, 4
          %s235 = sadd.s32 %s234, 1
          %p236 = scmp.lt.s32.totalorder %s20, 1
          %s237 = scalar_select %p236, %s20, 1
          %p238 = scmp.lt.s32.totalorder %s235, 9
          %s239 = scalar_select %p238, %s235, 9
          %s240 = smul.addr %s239, 2
          %s241 = smul.addr %s237, 20
          %s242 = sadd.s32 %s240, %s241
          %s243 = smul.addr %s242, 4
          %s244 = scalar_lea.vmem %s2, %s243
          %s245 = sadd.s32 %s21, 1
          %s246 = smul.u32 %s245, 4
          %s247 = sadd.s32 %s246, 1
        $region32: #{_downsample_forward.1} parent=19 // pred_fallthru
          _
      $region20: #{_downsample_forward.1} parent=5 // pred_fallthru
        _
      %p248 = scmp.le.s32.totalorder 1, %s13
      %p249 = scmp.lt.s32.totalorder %s13, 5
      %p250 = pnand %p248, %p249
      %p251 = pneg %p250
      // Predicated region
      $region33: #{_downsample_forward.1} parent=5 // pred_check
        _
      $region34: #{_downsample_forward.1} parent=5 // pred_check_branch
        %253 = sbr.rel (%p250) target = $region36
      $region35: #{_downsample_forward.1} parent=5 // pred_region
        %s254 = ssub.s32 %s13, 1
        %s255 = smul.u32 4, %s23
        %s256 = ssub.s32 10, %s255
        %p257 = scmp.lt.s32.totalorder %s256, 4
        %s258 = scalar_select %p257, %s256, 4
        %s259 = smul.u32 4, %s258
        %s260 = smul.u32 %s259, 2
        %p261 = scmp.lt.s32.totalorder %s22, 1
        %s262 = scalar_select %p261, %s22, 1
        %p263 = scmp.lt.s32.totalorder %s255, 9
        %s264 = scalar_select %p263, %s255, 9
        %s265 = smul.addr %s264, 2
        %s266 = smul.addr %s262, 20
        %s267 = sadd.s32 %s265, %s266
        %s268 = smul.addr %s267, 4
        %s269 = scalar_lea.vmem %s0, %s268
        %p270 = pneg %p53
        %p271 = pneg %p50
        %s272 = sadd.s32 %s23, 1
        %s273 = smul.u32 %s272, 4
        %p274 = scmp.lt.s32.totalorder %s22, 1
        %s275 = scalar_select %p274, %s22, 1
        %p276 = scmp.lt.s32.totalorder %s273, 9
        %s277 = scalar_select %p276, %s273, 9
        %s278 = smul.addr %s277, 2
        %s279 = smul.addr %s275, 20
        %s280 = sadd.s32 %s278, %s279
        %s281 = smul.addr %s280, 4
        %s282 = scalar_lea.vmem %s1, %s281
        %p283 = pneg %p85
        %p284 = pneg %p82
        %s285 = sadd.s32 %s23, 1
        %s286 = smul.u32 %s285, 4
        %s287 = sadd.s32 %s286, 1
        %p288 = scmp.lt.s32.totalorder %s22, 1
        %s289 = scalar_select %p288, %s22, 1
        %p290 = scmp.lt.s32.totalorder %s287, 9
        %s291 = scalar_select %p290, %s287, 9
        %s292 = smul.addr %s291, 2
        %s293 = smul.addr %s289, 20
        %s294 = sadd.s32 %s292, %s293
        %s295 = smul.addr %s294, 4
        %s296 = scalar_lea.vmem %s2, %s295
        %p297 = pneg %p119
        %p298 = pneg %p116
        %p299 = pneg %p140
        %p300 = pneg %p137
        %p301 = pneg %p168
        %p302 = pneg %p165
        %s303 = sand.u32 %s155, 1
        %s304 = scalar_lea.sflag [#allocation3], %s303
        %s305 = sand.u32 %s155, 1
        %s306 = smul.addr %s305, 32
        %s307 = scalar_lea.vmem [#allocation2], %s306
        %s308 = smul.u32 4, %s23
        %s309 = ssub.s32 10, %s308
        %p310 = scmp.lt.s32.totalorder %s309, 4
        %s311 = scalar_select %p310, %s309, 4
        %s312 = smul.u32 4, %s311
        %s313 = smul.u32 %s312, 2
        %p314 = scmp.lt.s32.totalorder %s22, 1
        %s315 = scalar_select %p314, %s22, 1
        %p316 = scmp.lt.s32.totalorder %s308, 9
        %s317 = scalar_select %p316, %s308, 9
        %s318 = smul.addr %s317, 2
        %s319 = smul.addr %s315, 20
        %s320 = sadd.s32 %s318, %s319
        %s321 = smul.addr %s320, 4
        %s322 = scalar_lea.vmem %s0, %s321
        %s323 = smul.u32 4, %s23
        %s324 = ssub.s32 10, %s323
        %p325 = scmp.lt.s32.totalorder %s324, 4
        %s326 = scalar_select %p325, %s324, 4
        %s327 = smul.u32 4, %s326
        %s328 = smul.u32 %s327, 2
        %s329 = sadd.s32 %s23, 1
        %s330 = smul.u32 %s329, 4
        %p331 = scmp.lt.s32.totalorder %s22, 1
        %s332 = scalar_select %p331, %s22, 1
        %p333 = scmp.lt.s32.totalorder %s330, 9
        %s334 = scalar_select %p333, %s330, 9
        %s335 = smul.addr %s334, 2
        %s336 = smul.addr %s332, 20
        %s337 = sadd.s32 %s335, %s336
        %s338 = smul.addr %s337, 4
        %s339 = scalar_lea.vmem %s1, %s338
        %s340 = sadd.s32 %s23, 1
        %s341 = smul.u32 %s340, 4
        %s342 = sadd.s32 %s23, 1
        %s343 = smul.u32 %s342, 4
        %s344 = sadd.s32 %s343, 1
        %p345 = scmp.lt.s32.totalorder %s22, 1
        %s346 = scalar_select %p345, %s22, 1
        %p347 = scmp.lt.s32.totalorder %s344, 9
        %s348 = scalar_select %p347, %s344, 9
        %s349 = smul.addr %s348, 2
        %s350 = smul.addr %s346, 20
        %s351 = sadd.s32 %s349, %s350
        %s352 = smul.addr %s351, 4
        %s353 = scalar_lea.vmem %s2, %s352
        %s354 = sadd.s32 %s23, 1
        %s355 = smul.u32 %s354, 4
        %s356 = sadd.s32 %s355, 1
        %s357 = smul.u32 4, %s23
        %v359 = vld [vmem:[%s3] sm:$0xf]
        %v360 = vld [vmem:[%s3 + $0x4] sm:$0xf]
        %v361 = vld [vmem:[%s3 + $0x8] sm:$0xf]
        %v362 = vld [vmem:[%s3 + $0xc] sm:$0xf]
        %v363 = vld [vmem:[%s322] sm:$0xf]
        %v364 = vld [vmem:[%s322 + $0x8] sm:$0xf]
        %v365 = vld [vmem:[%s322 + $0x10] sm:$0xf]
        %v366 = vld [vmem:[%s322 + $0x18] sm:$0xf]
        %v371 = vunpack.c.l.b16 %v363
        %v372 = vunpack.c.l.b16 %v364
        %v373 = vunpack.c.l.b16 %v365
        %v374 = vunpack.c.l.b16 %v366
        %v375 = vpack.c.b16 %v372, %v371
        %v376 = vpack.c.b16 %v374, %v373
        %v381 = vunpack.c.l.b16 %v359
        %v382 = vunpack.c.l.b16 %v360
        %v383 = vunpack.c.l.b16 %v361
        %v384 = vunpack.c.l.b16 %v362
        %v385 = vpack.c.b16 %v382, %v381
        %v386 = vpack.c.b16 %v384, %v383
        %vm389 = vcmask 261120
        %v391 = vsel %vm389, %v375, 0
        %v394 = vsel %vm389, %v376, 0
        %396 = vmatpush.bf16.msra.mxu0 0
        %397 = vmatpush.bf16.msra.mxu0 0
        %398 = vmatpush.bf16.msra.mxu0 0
        %399 = vmatpush.bf16.msra.mxu0 0
        %400 = vmatpush.bf16.msra.mxu0 0
        %401 = vmatpush.bf16.msra.mxu0 0
        %402 = vmatpush.bf16.msra.mxu0 %v386
        %403 = vmatpush.bf16.msra.mxu0 %v385
        %404 = vmatmul.bf16.gmra.mxu0 %v391
        %v405 = vpop.f32.mrf.mxu0
        %v406 = vadd.f32 0.0, %v405
        %v407 = vpop.f32.mrf.mxu0
        %v408 = vadd.f32 0.0, %v407
        %409 = vmatmul.bf16.gmra.mxu0 %v394
        %v410 = vpop.f32.mrf.mxu0
        %v411 = vadd.f32 0.0, %v410
        %v412 = vpop.f32.mrf.mxu0
        %v413 = vadd.f32 0.0, %v412
        %414 = vdwg.mxu0
        %vm415 = vcmask 130048
        %416 = vst.msk [vmem:[%s307] sm:$0xff] %vm415, %v406
        %417 = vst.msk [vmem:[%s307 + $0x8] sm:$0xff] %vm415, %v408
        %418 = vst.msk [vmem:[%s307 + $0x10] sm:$0xff] %vm415, %v411
        %419 = vst.msk [vmem:[%s307 + $0x18] sm:$0xff] %vm415, %v413
        %s420 = scalar_lea.vmem %s3, 16
        %v421 = vld [vmem:[%s420] sm:$0xf]
        %v422 = vld [vmem:[%s420 + $0x4] sm:$0xf]
        %v423 = vld [vmem:[%s420 + $0x8] sm:$0xf]
        %v424 = vld [vmem:[%s420 + $0xc] sm:$0xf]
        %v425 = vld [vmem:[%s322] sm:$0xf]
        %v426 = vld [vmem:[%s322 + $0x4] sm:$0x1]
        %v427 = vld [vmem:[%s322 + $0x8] sm:$0xf]
        %v428 = vld [vmem:[%s322 + $0xc] sm:$0x1]
        %v429 = vld [vmem:[%s322 + $0x10] sm:$0xf]
        %v430 = vld [vmem:[%s322 + $0x14] sm:$0x1]
        %v431 = vld [vmem:[%s322 + $0x18] sm:$0xf]
        %v432 = vld [vmem:[%s322 + $0x1c] sm:$0x1]
        %vm433 = vsmask.f32 3328
        %vm434 = vsmask.f32 7440
        %vm435 = vmor %vm433, %vm434
        %v437 = vshrl.u32 %v425, 16
        %v439 = vrot.slane %v437, 4
        %v440 = vshll.u32 %v425, 16
        %v442 = vrot.slane %v440, 5
        %v443 = vor.u32 %v439, %v442
        %v444 = vrot.slane %v443, 4
        %v446 = vshll.u32 %v426, 16
        %v448 = vrot.slane %v446, 5
        %v449 = vsel %vm435, %v444, %v448
        %v451 = vshrl.u32 %v427, 16
        %v453 = vrot.slane %v451, 4
        %v454 = vshll.u32 %v427, 16
        %v456 = vrot.slane %v454, 5
        %v457 = vor.u32 %v453, %v456
        %v458 = vrot.slane %v457, 4
        %v460 = vshll.u32 %v428, 16
        %v462 = vrot.slane %v460, 5
        %v463 = vsel %vm435, %v458, %v462
        %v465 = vshrl.u32 %v429, 16
        %v467 = vrot.slane %v465, 4
        %v468 = vshll.u32 %v429, 16
        %v470 = vrot.slane %v468, 5
        %v471 = vor.u32 %v467, %v470
        %v472 = vrot.slane %v471, 4
        %v474 = vshll.u32 %v430, 16
        %v476 = vrot.slane %v474, 5
        %v477 = vsel %vm435, %v472, %v476
        %v479 = vshrl.u32 %v431, 16
        %v481 = vrot.slane %v479, 4
        %v482 = vshll.u32 %v431, 16
        %v484 = vrot.slane %v482, 5
        %v485 = vor.u32 %v481, %v484
        %v486 = vrot.slane %v485, 4
        %v488 = vshll.u32 %v432, 16
        %v490 = vrot.slane %v488, 5
        %v491 = vsel %vm435, %v486, %v490
        %v492 = vunpack.c.l.b16 %v449
        %v493 = vunpack.c.l.b16 %v463
        %v494 = vunpack.c.l.b16 %v477
        %v495 = vunpack.c.l.b16 %v491
        %v496 = vpack.c.b16 %v493, %v492
        %v497 = vpack.c.b16 %v495, %v494
        %v502 = vunpack.c.l.b16 %v421
        %v503 = vunpack.c.l.b16 %v422
        %v504 = vunpack.c.l.b16 %v423
        %v505 = vunpack.c.l.b16 %v424
        %v506 = vpack.c.b16 %v503, %v502
        %v507 = vpack.c.b16 %v505, %v504
        %v511 = vsel %vm389, %v496, 0
        %v514 = vsel %vm389, %v497, 0
        %516 = vmatpush.bf16.msra.mxu0 0
        %517 = vmatpush.bf16.msra.mxu0 0
        %518 = vmatpush.bf16.msra.mxu0 0
        %519 = vmatpush.bf16.msra.mxu0 0
        %520 = vmatpush.bf16.msra.mxu0 0
        %521 = vmatpush.bf16.msra.mxu0 0
        %522 = vmatpush.bf16.msra.mxu0 %v507
        %523 = vmatpush.bf16.msra.mxu0 %v506
        %524 = vmatmul.bf16.gmra.mxu0 %v511
        %v525 = vpop.f32.mrf.mxu0
        %v526 = vadd.f32 0.0, %v525
        %v527 = vpop.f32.mrf.mxu0
        %v528 = vadd.f32 0.0, %v527
        %529 = vmatmul.bf16.gmra.mxu0 %v514
        %v530 = vpop.f32.mrf.mxu0
        %v531 = vadd.f32 0.0, %v530
        %v532 = vpop.f32.mrf.mxu0
        %v533 = vadd.f32 0.0, %v532
        %534 = vdwg.mxu0
        %v535 = vld [vmem:[%s307] sm:$0xff]
        %v536 = vld [vmem:[%s307 + $0x8] sm:$0xff]
        %v537 = vld [vmem:[%s307 + $0x10] sm:$0xff]
        %v538 = vld [vmem:[%s307 + $0x18] sm:$0xff]
        %v539 = vadd.f32 %v535, %v526
        %v540 = vadd.f32 %v536, %v528
        %v541 = vadd.f32 %v537, %v531
        %v542 = vadd.f32 %v538, %v533
        %543 = vst.msk [vmem:[%s307] sm:$0xff] %vm415, %v539
        %544 = vst.msk [vmem:[%s307 + $0x8] sm:$0xff] %vm415, %v540
        %545 = vst.msk [vmem:[%s307 + $0x10] sm:$0xff] %vm415, %v541
        %546 = vst.msk [vmem:[%s307 + $0x18] sm:$0xff] %vm415, %v542
        %s547 = scalar_lea.vmem %s3, 32
        %v548 = vld [vmem:[%s547] sm:$0xf]
        %v549 = vld [vmem:[%s547 + $0x4] sm:$0xf]
        %v550 = vld [vmem:[%s547 + $0x8] sm:$0xf]
        %v551 = vld [vmem:[%s547 + $0xc] sm:$0xf]
        %v552 = vld [vmem:[%s322] sm:$0xe]
        %v553 = vld [vmem:[%s322 + $0x4] sm:$0x1]
        %v554 = vld [vmem:[%s322 + $0x8] sm:$0xe]
        %v555 = vld [vmem:[%s322 + $0xc] sm:$0x1]
        %v556 = vld [vmem:[%s322 + $0x10] sm:$0xe]
        %v557 = vld [vmem:[%s322 + $0x14] sm:$0x1]
        %v558 = vld [vmem:[%s322 + $0x18] sm:$0xe]
        %v559 = vld [vmem:[%s322 + $0x1c] sm:$0x1]
        %vm568 = vcmask 1042432
        %vm569 = vcmask 1046532
        %vm570 = vmor %vm568, %vm569
        %v571 = vrot.slane %v552, 5
        %v572 = vrot.slane %v571, 4
        %v573 = vrot.slane %v553, 5
        %v574 = vsel %vm570, %v572, %v573
        %v575 = vrot.slane %v554, 5
        %v576 = vrot.slane %v575, 4
        %v577 = vrot.slane %v555, 5
        %v578 = vsel %vm570, %v576, %v577
        %v579 = vrot.slane %v556, 5
        %v580 = vrot.slane %v579, 4
        %v581 = vrot.slane %v557, 5
        %v582 = vsel %vm570, %v580, %v581
        %v583 = vrot.slane %v558, 5
        %v584 = vrot.slane %v583, 4
        %v585 = vrot.slane %v559, 5
        %v586 = vsel %vm570, %v584, %v585
        %v587 = vunpack.c.l.b16 %v574
        %v588 = vunpack.c.l.b16 %v578
        %v589 = vunpack.c.l.b16 %v582
        %v590 = vunpack.c.l.b16 %v586
        %v591 = vpack.c.b16 %v588, %v587
        %v592 = vpack.c.b16 %v590, %v589
        %v597 = vunpack.c.l.b16 %v548
        %v598 = vunpack.c.l.b16 %v549
        %v599 = vunpack.c.l.b16 %v550
        %v600 = vunpack.c.l.b16 %v551
        %v601 = vpack.c.b16 %v598, %v597
        %v602 = vpack.c.b16 %v600, %v599
        %v606 = vsel %vm389, %v591, 0
        %v609 = vsel %vm389, %v592, 0
        %611 = vmatpush.bf16.msra.mxu0 0
        %612 = vmatpush.bf16.msra.mxu0 0
        %613 = vmatpush.bf16.msra.mxu0 0
        %614 = vmatpush.bf16.msra.mxu0 0
        %615 = vmatpush.bf16.msra.mxu0 0
        %616 = vmatpush.bf16.msra.mxu0 0
        %617 = vmatpush.bf16.msra.mxu0 %v602
        %618 = vmatpush.bf16.msra.mxu0 %v601
        %619 = vmatmul.bf16.gmra.mxu0 %v606
        %v620 = vpop.f32.mrf.mxu0
        %v621 = vadd.f32 0.0, %v620
        %v622 = vpop.f32.mrf.mxu0
        %v623 = vadd.f32 0.0, %v622
        %624 = vmatmul.bf16.gmra.mxu0 %v609
        %v625 = vpop.f32.mrf.mxu0
        %v626 = vadd.f32 0.0, %v625
        %v627 = vpop.f32.mrf.mxu0
        %v628 = vadd.f32 0.0, %v627
        %629 = vdwg.mxu0
        %v630 = vld [vmem:[%s307] sm:$0xff]
        %v631 = vld [vmem:[%s307 + $0x8] sm:$0xff]
        %v632 = vld [vmem:[%s307 + $0x10] sm:$0xff]
        %v633 = vld [vmem:[%s307 + $0x18] sm:$0xff]
        %v634 = vadd.f32 %v630, %v621
        %v635 = vadd.f32 %v631, %v623
        %v636 = vadd.f32 %v632, %v626
        %v637 = vadd.f32 %v633, %v628
        %638 = vst.msk [vmem:[%s307] sm:$0xff] %vm415, %v634
        %639 = vst.msk [vmem:[%s307 + $0x8] sm:$0xff] %vm415, %v635
        %640 = vst.msk [vmem:[%s307 + $0x10] sm:$0xff] %vm415, %v636
        %641 = vst.msk [vmem:[%s307 + $0x18] sm:$0xff] %vm415, %v637
        %s642 = scalar_lea.vmem %s3, 48
        %v643 = vld [vmem:[%s642] sm:$0xf]
        %v644 = vld [vmem:[%s642 + $0x4] sm:$0xf]
        %v645 = vld [vmem:[%s642 + $0x8] sm:$0xf]
        %v646 = vld [vmem:[%s642 + $0xc] sm:$0xf]
        %s647 = scalar_lea.vmem %s322, 8
        %v648 = vld [vmem:[%s647] sm:$0xf]
        %v649 = vld [vmem:[%s647 + $0x8] sm:$0xf]
        %v650 = vld [vmem:[%s647 + $0x10] sm:$0xf]
        %v654 = vunpack.c.l.b16 %v648
        %v655 = vunpack.c.l.b16 %v649
        %v656 = vunpack.c.l.b16 %v650
        %v657 = vpack.c.b16 %v655, %v654
        %v658 = vpack.c.b16 %v656, %v656
        %v663 = vunpack.c.l.b16 %v643
        %v664 = vunpack.c.l.b16 %v644
        %v665 = vunpack.c.l.b16 %v645
        %v666 = vunpack.c.l.b16 %v646
        %v667 = vpack.c.b16 %v664, %v663
        %v668 = vpack.c.b16 %v666, %v665
        %v672 = vsel %vm389, %v657, 0
        %v675 = vsel %vm389, %v658, 0
        %677 = vmatpush.bf16.msra.mxu0 0
        %678 = vmatpush.bf16.msra.mxu0 0
        %679 = vmatpush.bf16.msra.mxu0 0
        %680 = vmatpush.bf16.msra.mxu0 0
        %681 = vmatpush.bf16.msra.mxu0 0
        %682 = vmatpush.bf16.msra.mxu0 0
        %683 = vmatpush.bf16.msra.mxu0 %v668
        %684 = vmatpush.bf16.msra.mxu0 %v667
        %685 = vmatmul.bf16.gmra.mxu0 %v672
        %v686 = vpop.f32.mrf.mxu0
        %v687 = vadd.f32 0.0, %v686
        %v688 = vpop.f32.mrf.mxu0
        %v689 = vadd.f32 0.0, %v688
        %690 = vmatmul.bf16.gmra.mxu0 %v675
        %v691 = vpop.f32.mrf.mxu0
        %v692 = vadd.f32 0.0, %v691
        %v693 = vpop.f32.mrf.mxu0
        %694 = vdwg.mxu0
        %v695 = vld [vmem:[%s307] sm:$0xff]
        %v696 = vld [vmem:[%s307 + $0x8] sm:$0xff]
        %v697 = vld [vmem:[%s307 + $0x10] sm:$0xff]
        %v698 = vadd.f32 %v695, %v687
        %v699 = vadd.f32 %v696, %v689
        %v700 = vadd.f32 %v697, %v692
        %701 = vst.msk [vmem:[%s307] sm:$0xff] %vm415, %v698
        %702 = vst.msk [vmem:[%s307 + $0x8] sm:$0xff] %vm415, %v699
        %703 = vst.msk [vmem:[%s307 + $0x10] sm:$0xff] %vm415, %v700
        %v704 = vld [vmem:[%s339] sm:$0xf]
        %v706 = vsel %vm389, %v704, 0
        %708 = vmatpush.bf16.msra.mxu0 0
        %709 = vmatpush.bf16.msra.mxu0 0
        %710 = vmatpush.bf16.msra.mxu0 0
        %711 = vmatpush.bf16.msra.mxu0 0
        %712 = vmatpush.bf16.msra.mxu0 0
        %713 = vmatpush.bf16.msra.mxu0 0
        %714 = vmatpush.bf16.msra.mxu0 %v668
        %715 = vmatpush.bf16.msra.mxu0 %v667
        %716 = vmatmul.bf16.gmra.mxu0 %v706
        %v717 = vpop.f32.mrf.mxu0
        %v718 = vadd.f32 0.0, %v717
        %v719 = vpop.f32.mrf.mxu0
        %720 = vdwg.mxu0
        %s721 = scalar_lea.vmem %s307, 24 [#allocation2]
        %v722 = vld [vmem:[%s721] sm:$0xff]
        %v723 = vadd.f32 %v722, %v718
        %724 = vst.msk [vmem:[%s721] sm:$0xff] %vm415, %v723
        %s725 = scalar_lea.vmem %s3, 64
        %v726 = vld [vmem:[%s725] sm:$0xf]
        %v727 = vld [vmem:[%s725 + $0x4] sm:$0xf]
        %v728 = vld [vmem:[%s725 + $0x8] sm:$0xf]
        %v729 = vld [vmem:[%s725 + $0xc] sm:$0xf]
        %v730 = vld [vmem:[%s647] sm:$0xf]
        %v731 = vld [vmem:[%s647 + $0x4] sm:$0x1]
        %v732 = vld [vmem:[%s647 + $0x8] sm:$0xf]
        %v733 = vld [vmem:[%s647 + $0xc] sm:$0x1]
        %v734 = vld [vmem:[%s647 + $0x10] sm:$0xf]
        %v735 = vld [vmem:[%s647 + $0x14] sm:$0x1]
        %v737 = vshrl.u32 %v730, 16
        %v739 = vrot.slane %v737, 4
        %v740 = vshll.u32 %v730, 16
        %v742 = vrot.slane %v740, 5
        %v743 = vor.u32 %v739, %v742
        %v744 = vrot.slane %v743, 4
        %v746 = vshll.u32 %v731, 16
        %v748 = vrot.slane %v746, 5
        %v749 = vsel %vm435, %v744, %v748
        %v751 = vshrl.u32 %v732, 16
        %v753 = vrot.slane %v751, 4
        %v754 = vshll.u32 %v732, 16
        %v756 = vrot.slane %v754, 5
        %v757 = vor.u32 %v753, %v756
        %v758 = vrot.slane %v757, 4
        %v760 = vshll.u32 %v733, 16
        %v762 = vrot.slane %v760, 5
        %v763 = vsel %vm435, %v758, %v762
        %v765 = vshrl.u32 %v734, 16
        %v767 = vrot.slane %v765, 4
        %v768 = vshll.u32 %v734, 16
        %v770 = vrot.slane %v768, 5
        %v771 = vor.u32 %v767, %v770
        %v772 = vrot.slane %v771, 4
        %v774 = vshll.u32 %v735, 16
        %v776 = vrot.slane %v774, 5
        %v777 = vsel %vm435, %v772, %v776
        %v778 = vunpack.c.l.b16 %v749
        %v779 = vunpack.c.l.b16 %v763
        %v780 = vunpack.c.l.b16 %v777
        %v781 = vpack.c.b16 %v779, %v778
        %v782 = vpack.c.b16 %v780, %v780
        %v787 = vunpack.c.l.b16 %v726
        %v788 = vunpack.c.l.b16 %v727
        %v789 = vunpack.c.l.b16 %v728
        %v790 = vunpack.c.l.b16 %v729
        %v791 = vpack.c.b16 %v788, %v787
        %v792 = vpack.c.b16 %v790, %v789
        %v796 = vsel %vm389, %v781, 0
        %v799 = vsel %vm389, %v782, 0
        %801 = vmatpush.bf16.msra.mxu0 0
        %802 = vmatpush.bf16.msra.mxu0 0
        %803 = vmatpush.bf16.msra.mxu0 0
        %804 = vmatpush.bf16.msra.mxu0 0
        %805 = vmatpush.bf16.msra.mxu0 0
        %806 = vmatpush.bf16.msra.mxu0 0
        %807 = vmatpush.bf16.msra.mxu0 %v792
        %808 = vmatpush.bf16.msra.mxu0 %v791
        %809 = vmatmul.bf16.gmra.mxu0 %v796
        %v810 = vpop.f32.mrf.mxu0
        %v811 = vadd.f32 0.0, %v810
        %v812 = vpop.f32.mrf.mxu0
        %v813 = vadd.f32 0.0, %v812
        %814 = vmatmul.bf16.gmra.mxu0 %v799
        %v815 = vpop.f32.mrf.mxu0
        %v816 = vadd.f32 0.0, %v815
        %v817 = vpop.f32.mrf.mxu0
        %818 = vdwg.mxu0
        %v819 = vld [vmem:[%s307] sm:$0xff]
        %v820 = vld [vmem:[%s307 + $0x8] sm:$0xff]
        %v821 = vld [vmem:[%s307 + $0x10] sm:$0xff]
        %v822 = vadd.f32 %v819, %v811
        %v823 = vadd.f32 %v820, %v813
        %v824 = vadd.f32 %v821, %v816
        %825 = vst.msk [vmem:[%s307] sm:$0xff] %vm415, %v822
        %826 = vst.msk [vmem:[%s307 + $0x8] sm:$0xff] %vm415, %v823
        %827 = vst.msk [vmem:[%s307 + $0x10] sm:$0xff] %vm415, %v824
        %v828 = vld [vmem:[%s339] sm:$0xf]
        %v829 = vld [vmem:[%s339 + $0x4] sm:$0x1]
        %v832 = vunpack.c.l.b16 %v828
        %v833 = vunpack.c.l.b16 %v829
        %v834 = vpack.c.b16 %v833, %v832
        %v836 = vshrl.u32 %v834, 16
        %v838 = vshll.u32 %v834, 16
        %v840 = vrot.slane %v838, 1
        %v841 = vor.u32 %v836, %v840
        %v843 = vsel %vm389, %v841, 0
        %845 = vmatpush.bf16.msra.mxu0 0
        %846 = vmatpush.bf16.msra.mxu0 0
        %847 = vmatpush.bf16.msra.mxu0 0
        %848 = vmatpush.bf16.msra.mxu0 0
        %849 = vmatpush.bf16.msra.mxu0 0
        %850 = vmatpush.bf16.msra.mxu0 0
        %851 = vmatpush.bf16.msra.mxu0 %v792
        %852 = vmatpush.bf16.msra.mxu0 %v791
        %853 = vmatmul.bf16.gmra.mxu0 %v843
        %v854 = vpop.f32.mrf.mxu0
        %v855 = vadd.f32 0.0, %v854
        %v856 = vpop.f32.mrf.mxu0
        %857 = vdwg.mxu0
        %v858 = vld [vmem:[%s721] sm:$0xff]
        %v859 = vadd.f32 %v858, %v855
        %860 = vst.msk [vmem:[%s721] sm:$0xff] %vm415, %v859
        %s861 = scalar_lea.vmem %s3, 80
        %v862 = vld [vmem:[%s861] sm:$0xf]
        %v863 = vld [vmem:[%s861 + $0x4] sm:$0xf]
        %v864 = vld [vmem:[%s861 + $0x8] sm:$0xf]
        %v865 = vld [vmem:[%s861 + $0xc] sm:$0xf]
        %v866 = vld [vmem:[%s647] sm:$0xe]
        %v867 = vld [vmem:[%s647 + $0x4] sm:$0x1]
        %v868 = vld [vmem:[%s647 + $0x8] sm:$0xe]
        %v869 = vld [vmem:[%s647 + $0xc] sm:$0x1]
        %v870 = vld [vmem:[%s647 + $0x10] sm:$0xe]
        %v871 = vld [vmem:[%s647 + $0x14] sm:$0x1]
        %v878 = vrot.slane %v866, 5
        %v879 = vrot.slane %v878, 4
        %v880 = vrot.slane %v867, 5
        %v881 = vsel %vm570, %v879, %v880
        %v882 = vrot.slane %v868, 5
        %v883 = vrot.slane %v882, 4
        %v884 = vrot.slane %v869, 5
        %v885 = vsel %vm570, %v883, %v884
        %v886 = vrot.slane %v870, 5
        %v887 = vrot.slane %v886, 4
        %v888 = vrot.slane %v871, 5
        %v889 = vsel %vm570, %v887, %v888
        %v890 = vunpack.c.l.b16 %v881
        %v891 = vunpack.c.l.b16 %v885
        %v892 = vunpack.c.l.b16 %v889
        %v893 = vpack.c.b16 %v891, %v890
        %v894 = vpack.c.b16 %v892, %v892
        %v899 = vunpack.c.l.b16 %v862
        %v900 = vunpack.c.l.b16 %v863
        %v901 = vunpack.c.l.b16 %v864
        %v902 = vunpack.c.l.b16 %v865
        %v903 = vpack.c.b16 %v900, %v899
        %v904 = vpack.c.b16 %v902, %v901
        %v908 = vsel %vm389, %v893, 0
        %v911 = vsel %vm389, %v894, 0
        %913 = vmatpush.bf16.msra.mxu0 0
        %914 = vmatpush.bf16.msra.mxu0 0
        %915 = vmatpush.bf16.msra.mxu0 0
        %916 = vmatpush.bf16.msra.mxu0 0
        %917 = vmatpush.bf16.msra.mxu0 0
        %918 = vmatpush.bf16.msra.mxu0 0
        %919 = vmatpush.bf16.msra.mxu0 %v904
        %920 = vmatpush.bf16.msra.mxu0 %v903
        %921 = vmatmul.bf16.gmra.mxu0 %v908
        %v922 = vpop.f32.mrf.mxu0
        %v923 = vadd.f32 0.0, %v922
        %v924 = vpop.f32.mrf.mxu0
        %v925 = vadd.f32 0.0, %v924
        %926 = vmatmul.bf16.gmra.mxu0 %v911
        %v927 = vpop.f32.mrf.mxu0
        %v928 = vadd.f32 0.0, %v927
        %v929 = vpop.f32.mrf.mxu0
        %930 = vdwg.mxu0
        %v931 = vld [vmem:[%s307] sm:$0xff]
        %v932 = vld [vmem:[%s307 + $0x8] sm:$0xff]
        %v933 = vld [vmem:[%s307 + $0x10] sm:$0xff]
        %v934 = vadd.f32 %v931, %v923
        %v935 = vadd.f32 %v932, %v925
        %v936 = vadd.f32 %v933, %v928
        %937 = vst.msk [vmem:[%s307] sm:$0xff] %vm415, %v934
        %938 = vst.msk [vmem:[%s307 + $0x8] sm:$0xff] %vm415, %v935
        %939 = vst.msk [vmem:[%s307 + $0x10] sm:$0xff] %vm415, %v936
        %v940 = vld [vmem:[%s339] sm:$0xe]
        %v941 = vld [vmem:[%s339 + $0x4] sm:$0x1]
        %v944 = vunpack.c.l.b16 %v940
        %v945 = vunpack.c.l.b16 %v941
        %v946 = vpack.c.b16 %v945, %v944
        %v947 = vrot.slane %v946, 1
        %v949 = vsel %vm389, %v947, 0
        %951 = vmatpush.bf16.msra.mxu0 0
        %952 = vmatpush.bf16.msra.mxu0 0
        %953 = vmatpush.bf16.msra.mxu0 0
        %954 = vmatpush.bf16.msra.mxu0 0
        %955 = vmatpush.bf16.msra.mxu0 0
        %956 = vmatpush.bf16.msra.mxu0 0
        %957 = vmatpush.bf16.msra.mxu0 %v904
        %958 = vmatpush.bf16.msra.mxu0 %v903
        %959 = vmatmul.bf16.gmra.mxu0 %v949
        %v960 = vpop.f32.mrf.mxu0
        %v961 = vadd.f32 0.0, %v960
        %v962 = vpop.f32.mrf.mxu0
        %963 = vdwg.mxu0
        %v964 = vld [vmem:[%s721] sm:$0xff]
        %v965 = vadd.f32 %v964, %v961
        %966 = vst.msk [vmem:[%s721] sm:$0xff] %vm415, %v965
        %s967 = scalar_lea.vmem %s3, 96
        %v968 = vld [vmem:[%s967] sm:$0xf]
        %v969 = vld [vmem:[%s967 + $0x4] sm:$0xf]
        %v970 = vld [vmem:[%s967 + $0x8] sm:$0xf]
        %v971 = vld [vmem:[%s967 + $0xc] sm:$0xf]
        %s972 = scalar_lea.vmem %s322, 16
        %v973 = vld [vmem:[%s972] sm:$0xf]
        %v974 = vld [vmem:[%s972 + $0x8] sm:$0xf]
        %v977 = vunpack.c.l.b16 %v973
        %v978 = vunpack.c.l.b16 %v974
        %v979 = vpack.c.b16 %v978, %v977
        %v984 = vunpack.c.l.b16 %v968
        %v985 = vunpack.c.l.b16 %v969
        %v986 = vunpack.c.l.b16 %v970
        %v987 = vunpack.c.l.b16 %v971
        %v988 = vpack.c.b16 %v985, %v984
        %v989 = vpack.c.b16 %v987, %v986
        %v993 = vsel %vm389, %v979, 0
        %995 = vmatpush.bf16.msra.mxu0 0
        %996 = vmatpush.bf16.msra.mxu0 0
        %997 = vmatpush.bf16.msra.mxu0 0
        %998 = vmatpush.bf16.msra.mxu0 0
        %999 = vmatpush.bf16.msra.mxu0 0
        %1000 = vmatpush.bf16.msra.mxu0 0
        %1001 = vmatpush.bf16.msra.mxu0 %v989
        %1002 = vmatpush.bf16.msra.mxu0 %v988
        %1003 = vmatmul.bf16.gmra.mxu0 %v993
        %v1004 = vpop.f32.mrf.mxu0
        %v1005 = vadd.f32 0.0, %v1004
        %v1006 = vpop.f32.mrf.mxu0
        %v1007 = vadd.f32 0.0, %v1006
        %1008 = vdwg.mxu0
        %v1009 = vld [vmem:[%s307] sm:$0xff]
        %v1010 = vld [vmem:[%s307 + $0x8] sm:$0xff]
        %v1011 = vadd.f32 %v1009, %v1005
        %v1012 = vadd.f32 %v1010, %v1007
        %1013 = vst.msk [vmem:[%s307] sm:$0xff] %vm415, %v1011
        %1014 = vst.msk [vmem:[%s307 + $0x8] sm:$0xff] %vm415, %v1012
        %v1015 = vld [vmem:[%s339] sm:$0xf]
        %v1017 = vsel %vm389, %v1015, 0
        %1019 = vmatpush.bf16.msra.mxu0 0
        %1020 = vmatpush.bf16.msra.mxu0 0
        %1021 = vmatpush.bf16.msra.mxu0 0
        %1022 = vmatpush.bf16.msra.mxu0 0
        %1023 = vmatpush.bf16.msra.mxu0 0
        %1024 = vmatpush.bf16.msra.mxu0 0
        %1025 = vmatpush.bf16.msra.mxu0 %v989
        %1026 = vmatpush.bf16.msra.mxu0 %v988
        %1027 = vmatmul.bf16.gmra.mxu0 %v1017
        %v1028 = vpop.f32.mrf.mxu0
        %v1029 = vadd.f32 0.0, %v1028
        %v1030 = vpop.f32.mrf.mxu0
        %1031 = vdwg.mxu0
        %s1032 = scalar_lea.vmem %s307, 16 [#allocation2]
        %v1033 = vld [vmem:[%s1032] sm:$0xff]
        %v1034 = vadd.f32 %v1033, %v1029
        %1035 = vst.msk [vmem:[%s1032] sm:$0xff] %vm415, %v1034
        %v1036 = vld [vmem:[%s353] sm:$0xf]
        %v1038 = vsel %vm389, %v1036, 0
        %1040 = vmatpush.bf16.msra.mxu0 0
        %1041 = vmatpush.bf16.msra.mxu0 0
        %1042 = vmatpush.bf16.msra.mxu0 0
        %1043 = vmatpush.bf16.msra.mxu0 0
        %1044 = vmatpush.bf16.msra.mxu0 0
        %1045 = vmatpush.bf16.msra.mxu0 0
        %1046 = vmatpush.bf16.msra.mxu0 %v989
        %1047 = vmatpush.bf16.msra.mxu0 %v988
        %1048 = vmatmul.bf16.gmra.mxu0 %v1038
        %v1049 = vpop.f32.mrf.mxu0
        %v1050 = vadd.f32 0.0, %v1049
        %v1051 = vpop.f32.mrf.mxu0
        %1052 = vdwg.mxu0
        %v1053 = vld [vmem:[%s721] sm:$0xff]
        %v1054 = vadd.f32 %v1053, %v1050
        %1055 = vst.msk [vmem:[%s721] sm:$0xff] %vm415, %v1054
        %s1056 = scalar_lea.vmem %s3, 112
        %v1057 = vld [vmem:[%s1056] sm:$0xf]
        %v1058 = vld [vmem:[%s1056 + $0x4] sm:$0xf]
        %v1059 = vld [vmem:[%s1056 + $0x8] sm:$0xf]
        %v1060 = vld [vmem:[%s1056 + $0xc] sm:$0xf]
        %v1061 = vld [vmem:[%s972] sm:$0xf]
        %v1062 = vld [vmem:[%s972 + $0x4] sm:$0x1]
        %v1063 = vld [vmem:[%s972 + $0x8] sm:$0xf]
        %v1064 = vld [vmem:[%s972 + $0xc] sm:$0x1]
        %v1066 = vshrl.u32 %v1061, 16
        %v1068 = vrot.slane %v1066, 4
        %v1069 = vshll.u32 %v1061, 16
        %v1071 = vrot.slane %v1069, 5
        %v1072 = vor.u32 %v1068, %v1071
        %v1073 = vrot.slane %v1072, 4
        %v1075 = vshll.u32 %v1062, 16
        %v1077 = vrot.slane %v1075, 5
        %v1078 = vsel %vm435, %v1073, %v1077
        %v1080 = vshrl.u32 %v1063, 16
        %v1082 = vrot.slane %v1080, 4
        %v1083 = vshll.u32 %v1063, 16
        %v1085 = vrot.slane %v1083, 5
        %v1086 = vor.u32 %v1082, %v1085
        %v1087 = vrot.slane %v1086, 4
        %v1089 = vshll.u32 %v1064, 16
        %v1091 = vrot.slane %v1089, 5
        %v1092 = vsel %vm435, %v1087, %v1091
        %v1093 = vunpack.c.l.b16 %v1078
        %v1094 = vunpack.c.l.b16 %v1092
        %v1095 = vpack.c.b16 %v1094, %v1093
        %v1100 = vunpack.c.l.b16 %v1057
        %v1101 = vunpack.c.l.b16 %v1058
        %v1102 = vunpack.c.l.b16 %v1059
        %v1103 = vunpack.c.l.b16 %v1060
        %v1104 = vpack.c.b16 %v1101, %v1100
        %v1105 = vpack.c.b16 %v1103, %v1102
        %v1109 = vsel %vm389, %v1095, 0
        %1111 = vmatpush.bf16.msra.mxu0 0
        %1112 = vmatpush.bf16.msra.mxu0 0
        %1113 = vmatpush.bf16.msra.mxu0 0
        %1114 = vmatpush.bf16.msra.mxu0 0
        %1115 = vmatpush.bf16.msra.mxu0 0
        %1116 = vmatpush.bf16.msra.mxu0 0
        %1117 = vmatpush.bf16.msra.mxu0 %v1105
        %1118 = vmatpush.bf16.msra.mxu0 %v1104
        %1119 = vmatmul.bf16.gmra.mxu0 %v1109
        %v1120 = vpop.f32.mrf.mxu0
        %v1121 = vadd.f32 0.0, %v1120
        %v1122 = vpop.f32.mrf.mxu0
        %v1123 = vadd.f32 0.0, %v1122
        %1124 = vdwg.mxu0
        %v1125 = vld [vmem:[%s307] sm:$0xff]
        %v1126 = vld [vmem:[%s307 + $0x8] sm:$0xff]
        %v1127 = vadd.f32 %v1125, %v1121
        %v1128 = vadd.f32 %v1126, %v1123
        %1129 = vst.msk [vmem:[%s307] sm:$0xff] %vm415, %v1127
        %1130 = vst.msk [vmem:[%s307 + $0x8] sm:$0xff] %vm415, %v1128
        %v1131 = vld [vmem:[%s339] sm:$0xf]
        %v1132 = vld [vmem:[%s339 + $0x4] sm:$0x1]
        %v1135 = vunpack.c.l.b16 %v1131
        %v1136 = vunpack.c.l.b16 %v1132
        %v1137 = vpack.c.b16 %v1136, %v1135
        %v1139 = vshrl.u32 %v1137, 16
        %v1141 = vshll.u32 %v1137, 16
        %v1143 = vrot.slane %v1141, 1
        %v1144 = vor.u32 %v1139, %v1143
        %v1146 = vsel %vm389, %v1144, 0
        %1148 = vmatpush.bf16.msra.mxu0 0
        %1149 = vmatpush.bf16.msra.mxu0 0
        %1150 = vmatpush.bf16.msra.mxu0 0
        %1151 = vmatpush.bf16.msra.mxu0 0
        %1152 = vmatpush.bf16.msra.mxu0 0
        %1153 = vmatpush.bf16.msra.mxu0 0
        %1154 = vmatpush.bf16.msra.mxu0 %v1105
        %1155 = vmatpush.bf16.msra.mxu0 %v1104
        %1156 = vmatmul.bf16.gmra.mxu0 %v1146
        %v1157 = vpop.f32.mrf.mxu0
        %v1158 = vadd.f32 0.0, %v1157
        %v1159 = vpop.f32.mrf.mxu0
        %1160 = vdwg.mxu0
        %v1161 = vld [vmem:[%s1032] sm:$0xff]
        %v1162 = vadd.f32 %v1161, %v1158
        %1163 = vst.msk [vmem:[%s1032] sm:$0xff] %vm415, %v1162
        %v1164 = vld [vmem:[%s353] sm:$0xf]
        %v1165 = vld [vmem:[%s353 + $0x4] sm:$0x1]
        %v1168 = vunpack.c.l.b16 %v1164
        %v1169 = vunpack.c.l.b16 %v1165
        %v1170 = vpack.c.b16 %v1169, %v1168
        %v1172 = vshrl.u32 %v1170, 16
        %v1174 = vshll.u32 %v1170, 16
        %v1176 = vrot.slane %v1174, 1
        %v1177 = vor.u32 %v1172, %v1176
        %v1179 = vsel %vm389, %v1177, 0
        %1181 = vmatpush.bf16.msra.mxu0 0
        %1182 = vmatpush.bf16.msra.mxu0 0
        %1183 = vmatpush.bf16.msra.mxu0 0
        %1184 = vmatpush.bf16.msra.mxu0 0
        %1185 = vmatpush.bf16.msra.mxu0 0
        %1186 = vmatpush.bf16.msra.mxu0 0
        %1187 = vmatpush.bf16.msra.mxu0 %v1105
        %1188 = vmatpush.bf16.msra.mxu0 %v1104
        %1189 = vmatmul.bf16.gmra.mxu0 %v1179
        %v1190 = vpop.f32.mrf.mxu0
        %v1191 = vadd.f32 0.0, %v1190
        %v1192 = vpop.f32.mrf.mxu0
        %1193 = vdwg.mxu0
        %v1194 = vld [vmem:[%s721] sm:$0xff]
        %v1195 = vadd.f32 %v1194, %v1191
        %1196 = vst.msk [vmem:[%s721] sm:$0xff] %vm415, %v1195
        %s1197 = scalar_lea.vmem %s3, 128
        %v1198 = vld [vmem:[%s1197] sm:$0xf]
        %v1199 = vld [vmem:[%s1197 + $0x4] sm:$0xf]
        %v1200 = vld [vmem:[%s1197 + $0x8] sm:$0xf]
        %v1201 = vld [vmem:[%s1197 + $0xc] sm:$0xf]
        %v1202 = vld [vmem:[%s972] sm:$0xe]
        %v1203 = vld [vmem:[%s972 + $0x4] sm:$0x1]
        %v1204 = vld [vmem:[%s972 + $0x8] sm:$0xe]
        %v1205 = vld [vmem:[%s972 + $0xc] sm:$0x1]
        %v1210 = vrot.slane %v1202, 5
        %v1211 = vrot.slane %v1210, 4
        %v1212 = vrot.slane %v1203, 5
        %v1213 = vsel %vm570, %v1211, %v1212
        %v1214 = vrot.slane %v1204, 5
        %v1215 = vrot.slane %v1214, 4
        %v1216 = vrot.slane %v1205, 5
        %v1217 = vsel %vm570, %v1215, %v1216
        %v1218 = vunpack.c.l.b16 %v1213
        %v1219 = vunpack.c.l.b16 %v1217
        %v1220 = vpack.c.b16 %v1219, %v1218
        %v1225 = vunpack.c.l.b16 %v1198
        %v1226 = vunpack.c.l.b16 %v1199
        %v1227 = vunpack.c.l.b16 %v1200
        %v1228 = vunpack.c.l.b16 %v1201
        %v1229 = vpack.c.b16 %v1226, %v1225
        %v1230 = vpack.c.b16 %v1228, %v1227
        %v1234 = vsel %vm389, %v1220, 0
        %1236 = vmatpush.bf16.msra.mxu0 0
        %1237 = vmatpush.bf16.msra.mxu0 0
        %1238 = vmatpush.bf16.msra.mxu0 0
        %1239 = vmatpush.bf16.msra.mxu0 0
        %1240 = vmatpush.bf16.msra.mxu0 0
        %1241 = vmatpush.bf16.msra.mxu0 0
        %1242 = vmatpush.bf16.msra.mxu0 %v1230
        %1243 = vmatpush.bf16.msra.mxu0 %v1229
        %1244 = vmatmul.bf16.gmra.mxu0 %v1234
        %v1245 = vpop.f32.mrf.mxu0
        %v1246 = vadd.f32 0.0, %v1245
        %v1247 = vpop.f32.mrf.mxu0
        %v1248 = vadd.f32 0.0, %v1247
        %1249 = vdwg.mxu0
        %v1250 = vld [vmem:[%s307] sm:$0xff]
        %v1251 = vld [vmem:[%s307 + $0x8] sm:$0xff]
        %v1252 = vadd.f32 %v1250, %v1246
        %v1253 = vadd.f32 %v1251, %v1248
        %1254 = vst.msk [vmem:[%s307] sm:$0xff] %vm415, %v1252
        %1255 = vst.msk [vmem:[%s307 + $0x8] sm:$0xff] %vm415, %v1253
        %v1256 = vld [vmem:[%s339] sm:$0xe]
        %v1257 = vld [vmem:[%s339 + $0x4] sm:$0x1]
        %v1260 = vunpack.c.l.b16 %v1256
        %v1261 = vunpack.c.l.b16 %v1257
        %v1262 = vpack.c.b16 %v1261, %v1260
        %v1263 = vrot.slane %v1262, 1
        %v1265 = vsel %vm389, %v1263, 0
        %1267 = vmatpush.bf16.msra.mxu0 0
        %1268 = vmatpush.bf16.msra.mxu0 0
        %1269 = vmatpush.bf16.msra.mxu0 0
        %1270 = vmatpush.bf16.msra.mxu0 0
        %1271 = vmatpush.bf16.msra.mxu0 0
        %1272 = vmatpush.bf16.msra.mxu0 0
        %1273 = vmatpush.bf16.msra.mxu0 %v1230
        %1274 = vmatpush.bf16.msra.mxu0 %v1229
        %1275 = vmatmul.bf16.gmra.mxu0 %v1265
        %v1276 = vpop.f32.mrf.mxu0
        %v1277 = vadd.f32 0.0, %v1276
        %v1278 = vpop.f32.mrf.mxu0
        %1279 = vdwg.mxu0
        %v1280 = vld [vmem:[%s1032] sm:$0xff]
        %v1281 = vadd.f32 %v1280, %v1277
        %1282 = vst.msk [vmem:[%s1032] sm:$0xff] %vm415, %v1281
        %v1283 = vld [vmem:[%s353] sm:$0xe]
        %v1284 = vld [vmem:[%s353 + $0x4] sm:$0x1]
        %v1287 = vunpack.c.l.b16 %v1283
        %v1288 = vunpack.c.l.b16 %v1284
        %v1289 = vpack.c.b16 %v1288, %v1287
        %v1290 = vrot.slane %v1289, 1
        %v1292 = vsel %vm389, %v1290, 0
        %1294 = vmatpush.bf16.msra.mxu0 0
        %1295 = vmatpush.bf16.msra.mxu0 0
        %1296 = vmatpush.bf16.msra.mxu0 0
        %1297 = vmatpush.bf16.msra.mxu0 0
        %1298 = vmatpush.bf16.msra.mxu0 0
        %1299 = vmatpush.bf16.msra.mxu0 0
        %1300 = vmatpush.bf16.msra.mxu0 %v1230
        %1301 = vmatpush.bf16.msra.mxu0 %v1229
        %1302 = vmatmul.bf16.gmra.mxu0 %v1292
        %v1303 = vpop.f32.mrf.mxu0
        %v1304 = vadd.f32 0.0, %v1303
        %v1305 = vpop.f32.mrf.mxu0
        %1306 = vdwg.mxu0
        %v1307 = vld [vmem:[%s721] sm:$0xff]
        %v1308 = vadd.f32 %v1307, %v1304
        %1309 = vst.msk [vmem:[%s721] sm:$0xff] %vm415, %v1308
        %s1310 = sand.u32 %s155, 1
        %s1311 = scalar_lea.sflag [#allocation3], %s1310
        %s1312 = sand.u32 %s155, 1
        %s1313 = smul.addr %s1312, 32
        %s1314 = scalar_lea.vmem [#allocation2], %s1313
        // Predicated region
        $region37: #{_downsample_forward.1} parent=35 // pred_check
          %p1315 = pneg %p165
        $region38: #{_downsample_forward.1} parent=35 // pred_check_branch
          %1317 = sbr.rel (%p1315) target = $region40
        $region39: #{_downsample_forward.1} parent=35 // pred_region
          %s1318 = smul.u32 4, %s23
          %1320 = vsyncadd %s1311, 0
          %s1321 = smul.addr %s22, 8
          %s1322 = sadd.s32 %s1318, %s1321
          %s1323 = smul.addr %s1322, 8
          %s1324 = scalar_lea.hbm %s4, %s1323
          %s1325 = sshll.u32 %s1314, 4
          %s1326 = int_to_ptr.vmem [resolvable:$true] %s1325
          %s1327 = sshll.u32 %s1324, 4
          %s1328 = int_to_ptr.hbm [resolvable:$true] %s1327
          %1333 = dma.vmem_to_hbm [thread:$0]  %s1326, 512, %s1328, %s1311, 128, 128, 8
        $region40: #{_downsample_forward.1} parent=35 // pred_fallthru
          _
      $region36: #{_downsample_forward.1} parent=5 // pred_fallthru
        _
      %p1334 = scmp.le.s32.totalorder 2, %s13
      // Predicated region
      $region41: #{_downsample_forward.1} parent=5 // pred_check
        %p1335 = pneg %p1334
      $region42: #{_downsample_forward.1} parent=5 // pred_check_branch
        %1337 = sbr.rel (%p1335) target = $region44
      $region43: #{_downsample_forward.1} parent=5 // pred_region
        %s1338 = ssub.s32 %s13, 2
        // Predicated region
        $region45: #{_downsample_forward.1} parent=43 // pred_check
          %p1339 = pneg %p171
        $region46: #{_downsample_forward.1} parent=43 // pred_check_branch
          %1341 = sbr.rel (%p1339) target = $region48
        $region47: #{_downsample_forward.1} parent=43 // pred_region
          %s1342 = sand.u32 %s156, 1
          %s1343 = scalar_lea.sflag [#allocation3], %s1342
          %s1344 = sand.u32 %s156, 1
          %s1345 = smul.addr %s1344, 32
          %s1346 = scalar_lea.vmem [#allocation2], %s1345
          %1348 = dma.done %s1343, 512
        $region48: #{_downsample_forward.1} parent=43 // pred_fallthru
          _
      $region44: #{_downsample_forward.1} parent=5 // pred_fallthru
        _
    $region6: #{_downsample_forward.1} parent=1 // loop_footer
      %s17 = sadd.s32 1, %s13
    $region7: #{_downsample_forward.1} parent=1 // loop_footer_branch
      %12 = sbr.rel target = $region3
    $region8: #{_downsample_forward.1} parent=1 // loop_exit
      _
    %1349 = vsyncpa [#allocation3], 1
    %s1350 = scalar_lea.sflag [#allocation3], 1
    %1351 = vsyncpa %s1350, 1

</llo_original>
